<compile_context>
chip_gen: v5e
topology: v5e:2x2
jax: 0.10.0
libtpu: 0.0.40
codegen_flags: <defaults>
</compile_context>

<pallas_src>
import jax
import jax.numpy as jnp
import numpy as np
from jax.experimental import pallas as pl
from jax.experimental.pallas import tpu as pltpu

# Small, self-consistent stand-in model dims.
B, S, H = 2, 8, 32          # batch, seq, hidden
NUM_HEADS = 4
DH = H // NUM_HEADS
FFN = 64
VOCAB = 128
NUM_LAYERS = 2
LN_EPS = 1e-7               # DeBERTa config layer_norm_eps (nn.LayerNorm default is 1e-5)
OUT_PAD = 128               # lane-dense output width; wrapper slices [:, :1]
SCALE = 1.0 / float(DH) ** 0.5


# ---------------------------------------------------------------------------
# Fused Pallas kernel: encoder layers + CLS pooling + classifier + sigmoid
# ---------------------------------------------------------------------------
def fused_forward_kernel(x_ref, mask_ref, hmask_ref,
                         wqkv_ref, bqkv_ref, wo_ref, bo_ref,
                         ln1g_ref, ln1b_ref,
                         w1_ref, b1_ref, w2_ref, b2_ref,
                         ln2g_ref, ln2b_ref,
                         wc_ref, bc_ref,
                         out_ref):
    # Whole batch in one step, flattened for the projection matmuls.
    x = x_ref[...].astype(jnp.float32).reshape(B * S, H)     # (B*S, H)
    addl = (mask_ref[...] - 1.0) * 1e9                       # (B, 1, S): 0 keep / -1e9 pad
    hmask = hmask_ref[...]                                   # (NUM_HEADS, 1, H) lane masks

    for l in range(NUM_LAYERS):                              # static unrolled layer loop
        # ---- fused QKV projection (one MXU matmul) --------------------------
        qkv = jnp.dot(x, wqkv_ref[l], preferred_element_type=jnp.float32) + bqkv_ref[l]
        q = qkv[:, 0 * H:1 * H].reshape(B, S, H)
        k = qkv[:, 1 * H:2 * H].reshape(B, S, H)
        v = qkv[:, 2 * H:3 * H].reshape(B, S, H)

        # ---- multi-head attention via head-mask trick -----------------------
        # (no lane slicing of DH-wide heads, no lane-axis concatenate)
        attn = jnp.zeros((B, S, H), jnp.float32)
        for h in range(NUM_HEADS):
            qh = q * hmask[h]                                # zero lanes outside head h
            s = jnp.einsum('bqd,bkd->bqk', qh, k,
                           preferred_element_type=jnp.float32) * SCALE     # (B, S, S)
            s = s + addl                                     # mask padded keys
            s = s - jnp.max(s, axis=-1, keepdims=True)
            p = jnp.exp(s)
            p = p * pl.reciprocal(jnp.sum(p, axis=-1, keepdims=True), approx=True)
            attn = attn + jnp.einsum('bqk,bkd->bqd', p, v * hmask[h],
                                     preferred_element_type=jnp.float32)

        a = jnp.dot(attn.reshape(B * S, H), wo_ref[l],
                    preferred_element_type=jnp.float32) + bo_ref[l]

        # ---- residual + LayerNorm 1 -----------------------------------------
        h1 = x + a
        mu = jnp.mean(h1, axis=-1, keepdims=True)
        var = jnp.mean((h1 - mu) ** 2, axis=-1, keepdims=True)
        h1 = (h1 - mu) * jax.lax.rsqrt(var + LN_EPS) * ln1g_ref[l] + ln1b_ref[l]

        # ---- feed-forward ----------------------------------------------------
        f = jnp.dot(h1, w1_ref[l], preferred_element_type=jnp.float32) + b1_ref[l]
        f = jax.nn.gelu(f, approximate=True)   # tanh approx (EUP); exact erf differs slightly
        f = jnp.dot(f, w2_ref[l], preferred_element_type=jnp.float32) + b2_ref[l]

        # ---- residual + LayerNorm 2 -----------------------------------------
        h2 = h1 + f
        mu2 = jnp.mean(h2, axis=-1, keepdims=True)
        var2 = jnp.mean((h2 - mu2) ** 2, axis=-1, keepdims=True)
        x = (h2 - mu2) * jax.lax.rsqrt(var2 + LN_EPS) * ln2g_ref[l] + ln2b_ref[l]

    # ---- CLS pooling + classifier + sigmoid (fused epilogue) -----------------
    pooled = x.reshape(B, S, H)[:, 0, :]                                  # (B, H)
    # dropout(p=0.1) is identity at inference time.
    logits = jnp.sum(pooled * wc_ref[...], axis=-1, keepdims=True) + bc_ref[...]   # (B, 1)
    prob = jax.nn.sigmoid(logits)
    # Lane-dense store: broadcast the probability across 128 lanes.
    out_ref[...] = jnp.broadcast_to(prob, (B, OUT_PAD)).astype(out_ref.dtype)


# ---------------------------------------------------------------------------
# Wrapper
# ---------------------------------------------------------------------------
def fused_forward(x_emb, mask_f32, p):
    # Single pallas_call, no grid: every operand is a full-array VMEM block.
    return pl.pallas_call(
        fused_forward_kernel,
        out_shape=jax.ShapeDtypeStruct((B, OUT_PAD), jnp.float32),
        compiler_params=pltpu.CompilerParams(vmem_limit_bytes=32 * 1024 * 1024),
    )(x_emb, mask_f32, p["head_mask"],
      p["wqkv"], p["bqkv"], p["wo"], p["bo"],
      p["ln1_g"], p["ln1_b"],
      p["w1"], p["b1"], p["w2"], p["b2"],
      p["ln2_g"], p["ln2_b"],
      p["wc"], p["bc"])


def init_params(key):
    def nrm(k, shape, scale=0.02):
        return (scale * jax.random.normal(k, shape)).astype(jnp.float32)

    ks = iter(jax.random.split(key, 16))

    head_mask = np.zeros((NUM_HEADS, 1, H), np.float32)
    for h in range(NUM_HEADS):
        head_mask[h, 0, h * DH:(h + 1) * DH] = 1.0

    return {
        "tok_emb": nrm(next(ks), (VOCAB, H)),
        "pos_emb": nrm(next(ks), (S, H)),
        # per-layer weights stacked along a leading layer axis (static-indexed in-kernel)
        "wqkv": nrm(next(ks), (NUM_LAYERS, H, 3 * H)),
        "bqkv": jnp.zeros((NUM_LAYERS, 1, 3 * H), jnp.float32),
        "wo":   nrm(next(ks), (NUM_LAYERS, H, H)),
        "bo":   jnp.zeros((NUM_LAYERS, 1, H), jnp.float32),
        "ln1_g": jnp.ones((NUM_LAYERS, 1, H), jnp.float32),
        "ln1_b": jnp.zeros((NUM_LAYERS, 1, H), jnp.float32),
        "w1":   nrm(next(ks), (NUM_LAYERS, H, FFN)),
        "b1":   jnp.zeros((NUM_LAYERS, 1, FFN), jnp.float32),
        "w2":   nrm(next(ks), (NUM_LAYERS, FFN, H)),
        "b2":   jnp.zeros((NUM_LAYERS, 1, H), jnp.float32),
        "ln2_g": jnp.ones((NUM_LAYERS, 1, H), jnp.float32),
        "ln2_b": jnp.zeros((NUM_LAYERS, 1, H), jnp.float32),
        "wc":   nrm(next(ks), (1, H)),
        "bc":   jnp.zeros((1, 1), jnp.float32),
        "head_mask": jnp.asarray(head_mask),
    }


@jax.jit
def plagiarism_detector_forward(params, input_ids, attention_mask):
    # glue: token + position embedding gather (left in plain JAX)
    x = jnp.take(params["tok_emb"], input_ids, axis=0) + params["pos_emb"][None]
    x = x.astype(jnp.float32)                                  # (B, S, H)
    mask_f32 = attention_mask.astype(jnp.float32)[:, None, :]  # (B, 1, S)

    out = fused_forward(x, mask_f32, params)                   # (B, OUT_PAD)
    return out[:, :1]                                          # probabilities, (B, 1)


if __name__ == "__main__":
    key = jax.random.PRNGKey(0)
    k_param, k_ids = jax.random.split(key)

    params = init_params(k_param)
    input_ids = jax.random.randint(k_ids, (B, S), 0, VOCAB, dtype=jnp.int32)
    attention_mask = jnp.ones((B, S), jnp.int32).at[1, S - 2:].set(0)  # pad tail of batch 1

    probs = plagiarism_detector_forward(params, input_ids, attention_mask)
    jax.block_until_ready(probs)

    assert probs.shape == (B, 1) and probs.dtype == jnp.float32
    assert bool(jnp.all((probs >= 0.0) & (probs <= 1.0)))
    print("KERNEL_OK")
</pallas_src>

<mosaic_0001>
module attributes {stable_mosaic.version = 11 : i64} {
  func.func @fused_forward_kernel(%arg0: memref<2x8x32xf32, #tpu.memory_space<vmem>>, %arg1: memref<2x1x8xf32, #tpu.memory_space<vmem>>, %arg2: memref<4x1x32xf32, #tpu.memory_space<vmem>>, %arg3: memref<2x32x96xf32, #tpu.memory_space<vmem>>, %arg4: memref<2x1x96xf32, #tpu.memory_space<vmem>>, %arg5: memref<2x32x32xf32, #tpu.memory_space<vmem>>, %arg6: memref<2x1x32xf32, #tpu.memory_space<vmem>>, %arg7: memref<2x1x32xf32, #tpu.memory_space<vmem>>, %arg8: memref<2x1x32xf32, #tpu.memory_space<vmem>>, %arg9: memref<2x32x64xf32, #tpu.memory_space<vmem>>, %arg10: memref<2x1x64xf32, #tpu.memory_space<vmem>>, %arg11: memref<2x64x32xf32, #tpu.memory_space<vmem>>, %arg12: memref<2x1x32xf32, #tpu.memory_space<vmem>>, %arg13: memref<2x1x32xf32, #tpu.memory_space<vmem>>, %arg14: memref<2x1x32xf32, #tpu.memory_space<vmem>>, %arg15: memref<1x32xf32, #tpu.memory_space<vmem>>, %arg16: memref<1x1xf32, #tpu.memory_space<vmem>>, %arg17: memref<2x128xf32, #tpu.memory_space<vmem>>) attributes {dimension_semantics = [], scalar_prefetch = 0 : i64, scratch_operands = 0 : i64, tpu.core_type = #tpu.core_type<tc>} {
    %c0 = arith.constant 0 : index
    %c0_0 = arith.constant 0 : index
    %c0_1 = arith.constant 0 : index
    %0 = vector.load %arg0[%c0, %c0_0, %c0_1] : memref<2x8x32xf32, #tpu.memory_space<vmem>>, vector<2x8x32xf32>
    %1 = vector.shape_cast %0 : vector<2x8x32xf32> to vector<16x32xf32>
    %c0_2 = arith.constant 0 : index
    %c0_3 = arith.constant 0 : index
    %c0_4 = arith.constant 0 : index
    %2 = vector.load %arg1[%c0_2, %c0_3, %c0_4] : memref<2x1x8xf32, #tpu.memory_space<vmem>>, vector<2x1x8xf32>
    %cst = arith.constant 1.000000e+00 : f32
    %3 = vector.broadcast %cst : f32 to vector<2x1x8xf32>
    %4 = arith.subf %2, %3 : vector<2x1x8xf32>
    %cst_5 = arith.constant 1.000000e+09 : f32
    %5 = vector.broadcast %cst_5 : f32 to vector<2x1x8xf32>
    %6 = arith.mulf %4, %5 : vector<2x1x8xf32>
    %c0_6 = arith.constant 0 : index
    %c0_7 = arith.constant 0 : index
    %c0_8 = arith.constant 0 : index
    %7 = vector.load %arg2[%c0_6, %c0_7, %c0_8] : memref<4x1x32xf32, #tpu.memory_space<vmem>>, vector<4x1x32xf32>
    %c0_9 = arith.constant 0 : index
    %c0_10 = arith.constant 0 : index
    %c0_11 = arith.constant 0 : index
    %8 = vector.load %arg3[%c0_9, %c0_10, %c0_11] : memref<2x32x96xf32, #tpu.memory_space<vmem>>, vector<1x32x96xf32>
    %9 = vector.shape_cast %8 : vector<1x32x96xf32> to vector<32x96xf32>
    %cst_12 = arith.constant dense<0.000000e+00> : vector<16x96xf32>
    %10 = tpu.matmul %1, %9, %cst_12 {dimension_numbers = #tpu.dot_dimension_numbers<[1], [0], [0], [1], [0, 0, 1, 1], [], []>} : vector<16x32xf32>, vector<32x96xf32>, vector<16x96xf32> -> vector<16x96xf32>
    %c0_13 = arith.constant 0 : index
    %c0_14 = arith.constant 0 : index
    %c0_15 = arith.constant 0 : index
    %11 = vector.load %arg4[%c0_13, %c0_14, %c0_15] : memref<2x1x96xf32, #tpu.memory_space<vmem>>, vector<1x1x96xf32>
    %12 = vector.shape_cast %11 : vector<1x1x96xf32> to vector<1x96xf32>
    %13 = vector.broadcast %12 : vector<1x96xf32> to vector<16x96xf32>
    %14 = arith.addf %10, %13 : vector<16x96xf32>
    %15 = vector.extract_strided_slice %14 {offsets = [0, 0], sizes = [16, 32], strides = [1, 1]} : vector<16x96xf32> to vector<16x32xf32>
    %16 = vector.shape_cast %15 : vector<16x32xf32> to vector<2x8x32xf32>
    %17 = vector.extract_strided_slice %14 {offsets = [0, 32], sizes = [16, 32], strides = [1, 1]} : vector<16x96xf32> to vector<16x32xf32>
    %18 = vector.shape_cast %17 : vector<16x32xf32> to vector<2x8x32xf32>
    %19 = vector.extract_strided_slice %14 {offsets = [0, 64], sizes = [16, 32], strides = [1, 1]} : vector<16x96xf32> to vector<16x32xf32>
    %20 = vector.shape_cast %19 : vector<16x32xf32> to vector<2x8x32xf32>
    %cst_16 = arith.constant 0.000000e+00 : f32
    %21 = vector.broadcast %cst_16 : f32 to vector<2x8x32xf32>
    %22 = vector.extract_strided_slice %7 {offsets = [0, 0, 0], sizes = [1, 1, 32], strides = [1, 1, 1]} : vector<4x1x32xf32> to vector<1x1x32xf32>
    %23 = vector.shape_cast %22 : vector<1x1x32xf32> to vector<1x32xf32>
    %24 = vector.shape_cast %23 : vector<1x32xf32> to vector<1x1x32xf32>
    %25 = vector.broadcast %24 : vector<1x1x32xf32> to vector<2x8x32xf32>
    %26 = arith.mulf %16, %25 : vector<2x8x32xf32>
    "tpu.trace_start"() <{level = 10 : i32, message = "bqd,bkd->bqk"}> : () -> ()
    %cst_17 = arith.constant dense<0.000000e+00> : vector<2x8x8xf32>
    %27 = tpu.matmul %26, %18, %cst_17 {dimension_numbers = #tpu.dot_dimension_numbers<[2], [2], [1], [1], [0, 0, 0, 1, 1, 1], [0], [0]>} : vector<2x8x32xf32>, vector<2x8x32xf32>, vector<2x8x8xf32> -> vector<2x8x8xf32>
    "tpu.trace_stop"() : () -> ()
    %cst_18 = arith.constant 0.353553385 : f32
    %28 = vector.broadcast %cst_18 : f32 to vector<2x8x8xf32>
    %29 = arith.mulf %27, %28 : vector<2x8x8xf32>
    %30 = vector.broadcast %6 : vector<2x1x8xf32> to vector<2x8x8xf32>
    %31 = arith.addf %29, %30 : vector<2x8x8xf32>
    %cst_19 = arith.constant dense<0xFF800000> : vector<2x8xf32>
    %32 = vector.multi_reduction <maximumf>, %31, %cst_19 [2] : vector<2x8x8xf32> to vector<2x8xf32>
    %33 = vector.shape_cast %32 : vector<2x8xf32> to vector<2x8x1xf32>
    %34 = vector.broadcast %33 : vector<2x8x1xf32> to vector<2x8x8xf32>
    %35 = arith.subf %31, %34 : vector<2x8x8xf32>
    %36 = math.exp %35 : vector<2x8x8xf32>
    %cst_20 = arith.constant dense<0.000000e+00> : vector<2x8xf32>
    %37 = vector.multi_reduction <add>, %36, %cst_20 [2] : vector<2x8x8xf32> to vector<2x8xf32>
    %38 = vector.shape_cast %37 : vector<2x8xf32> to vector<2x8x1xf32>
    %39 = tpu.reciprocal %38 {approx = true} : vector<2x8x1xf32> -> vector<2x8x1xf32>
    %40 = vector.broadcast %39 : vector<2x8x1xf32> to vector<2x8x8xf32>
    %41 = arith.mulf %36, %40 : vector<2x8x8xf32>
    %42 = vector.extract_strided_slice %7 {offsets = [0, 0, 0], sizes = [1, 1, 32], strides = [1, 1, 1]} : vector<4x1x32xf32> to vector<1x1x32xf32>
    %43 = vector.shape_cast %42 : vector<1x1x32xf32> to vector<1x32xf32>
    %44 = vector.shape_cast %43 : vector<1x32xf32> to vector<1x1x32xf32>
    %45 = vector.broadcast %44 : vector<1x1x32xf32> to vector<2x8x32xf32>
    %46 = arith.mulf %20, %45 : vector<2x8x32xf32>
    "tpu.trace_start"() <{level = 10 : i32, message = "bqk,bkd->bqd"}> : () -> ()
    %cst_21 = arith.constant dense<0.000000e+00> : vector<2x8x32xf32>
    %47 = tpu.matmul %41, %46, %cst_21 {dimension_numbers = #tpu.dot_dimension_numbers<[2], [1], [1], [2], [0, 0, 0, 1, 1, 2], [0], [0]>} : vector<2x8x8xf32>, vector<2x8x32xf32>, vector<2x8x32xf32> -> vector<2x8x32xf32>
    "tpu.trace_stop"() : () -> ()
    %48 = arith.addf %21, %47 : vector<2x8x32xf32>
    %49 = vector.extract_strided_slice %7 {offsets = [1, 0, 0], sizes = [1, 1, 32], strides = [1, 1, 1]} : vector<4x1x32xf32> to vector<1x1x32xf32>
    %50 = vector.shape_cast %49 : vector<1x1x32xf32> to vector<1x32xf32>
    %51 = vector.shape_cast %50 : vector<1x32xf32> to vector<1x1x32xf32>
    %52 = vector.broadcast %51 : vector<1x1x32xf32> to vector<2x8x32xf32>
    %53 = arith.mulf %16, %52 : vector<2x8x32xf32>
    "tpu.trace_start"() <{level = 10 : i32, message = "bqd,bkd->bqk"}> : () -> ()
    %cst_22 = arith.constant dense<0.000000e+00> : vector<2x8x8xf32>
    %54 = tpu.matmul %53, %18, %cst_22 {dimension_numbers = #tpu.dot_dimension_numbers<[2], [2], [1], [1], [0, 0, 0, 1, 1, 1], [0], [0]>} : vector<2x8x32xf32>, vector<2x8x32xf32>, vector<2x8x8xf32> -> vector<2x8x8xf32>
    "tpu.trace_stop"() : () -> ()
    %cst_23 = arith.constant 0.353553385 : f32
    %55 = vector.broadcast %cst_23 : f32 to vector<2x8x8xf32>
    %56 = arith.mulf %54, %55 : vector<2x8x8xf32>
    %57 = vector.broadcast %6 : vector<2x1x8xf32> to vector<2x8x8xf32>
    %58 = arith.addf %56, %57 : vector<2x8x8xf32>
    %cst_24 = arith.constant dense<0xFF800000> : vector<2x8xf32>
    %59 = vector.multi_reduction <maximumf>, %58, %cst_24 [2] : vector<2x8x8xf32> to vector<2x8xf32>
    %60 = vector.shape_cast %59 : vector<2x8xf32> to vector<2x8x1xf32>
    %61 = vector.broadcast %60 : vector<2x8x1xf32> to vector<2x8x8xf32>
    %62 = arith.subf %58, %61 : vector<2x8x8xf32>
    %63 = math.exp %62 : vector<2x8x8xf32>
    %cst_25 = arith.constant dense<0.000000e+00> : vector<2x8xf32>
    %64 = vector.multi_reduction <add>, %63, %cst_25 [2] : vector<2x8x8xf32> to vector<2x8xf32>
    %65 = vector.shape_cast %64 : vector<2x8xf32> to vector<2x8x1xf32>
    %66 = tpu.reciprocal %65 {approx = true} : vector<2x8x1xf32> -> vector<2x8x1xf32>
    %67 = vector.broadcast %66 : vector<2x8x1xf32> to vector<2x8x8xf32>
    %68 = arith.mulf %63, %67 : vector<2x8x8xf32>
    %69 = vector.extract_strided_slice %7 {offsets = [1, 0, 0], sizes = [1, 1, 32], strides = [1, 1, 1]} : vector<4x1x32xf32> to vector<1x1x32xf32>
    %70 = vector.shape_cast %69 : vector<1x1x32xf32> to vector<1x32xf32>
    %71 = vector.shape_cast %70 : vector<1x32xf32> to vector<1x1x32xf32>
    %72 = vector.broadcast %71 : vector<1x1x32xf32> to vector<2x8x32xf32>
    %73 = arith.mulf %20, %72 : vector<2x8x32xf32>
    "tpu.trace_start"() <{level = 10 : i32, message = "bqk,bkd->bqd"}> : () -> ()
    %cst_26 = arith.constant dense<0.000000e+00> : vector<2x8x32xf32>
    %74 = tpu.matmul %68, %73, %cst_26 {dimension_numbers = #tpu.dot_dimension_numbers<[2], [1], [1], [2], [0, 0, 0, 1, 1, 2], [0], [0]>} : vector<2x8x8xf32>, vector<2x8x32xf32>, vector<2x8x32xf32> -> vector<2x8x32xf32>
    "tpu.trace_stop"() : () -> ()
    %75 = arith.addf %48, %74 : vector<2x8x32xf32>
    %76 = vector.extract_strided_slice %7 {offsets = [2, 0, 0], sizes = [1, 1, 32], strides = [1, 1, 1]} : vector<4x1x32xf32> to vector<1x1x32xf32>
    %77 = vector.shape_cast %76 : vector<1x1x32xf32> to vector<1x32xf32>
    %78 = vector.shape_cast %77 : vector<1x32xf32> to vector<1x1x32xf32>
    %79 = vector.broadcast %78 : vector<1x1x32xf32> to vector<2x8x32xf32>
    %80 = arith.mulf %16, %79 : vector<2x8x32xf32>
    "tpu.trace_start"() <{level = 10 : i32, message = "bqd,bkd->bqk"}> : () -> ()
    %cst_27 = arith.constant dense<0.000000e+00> : vector<2x8x8xf32>
    %81 = tpu.matmul %80, %18, %cst_27 {dimension_numbers = #tpu.dot_dimension_numbers<[2], [2], [1], [1], [0, 0, 0, 1, 1, 1], [0], [0]>} : vector<2x8x32xf32>, vector<2x8x32xf32>, vector<2x8x8xf32> -> vector<2x8x8xf32>
    "tpu.trace_stop"() : () -> ()
    %cst_28 = arith.constant 0.353553385 : f32
    %82 = vector.broadcast %cst_28 : f32 to vector<2x8x8xf32>
    %83 = arith.mulf %81, %82 : vector<2x8x8xf32>
    %84 = vector.broadcast %6 : vector<2x1x8xf32> to vector<2x8x8xf32>
    %85 = arith.addf %83, %84 : vector<2x8x8xf32>
    %cst_29 = arith.constant dense<0xFF800000> : vector<2x8xf32>
    %86 = vector.multi_reduction <maximumf>, %85, %cst_29 [2] : vector<2x8x8xf32> to vector<2x8xf32>
    %87 = vector.shape_cast %86 : vector<2x8xf32> to vector<2x8x1xf32>
    %88 = vector.broadcast %87 : vector<2x8x1xf32> to vector<2x8x8xf32>
    %89 = arith.subf %85, %88 : vector<2x8x8xf32>
    %90 = math.exp %89 : vector<2x8x8xf32>
    %cst_30 = arith.constant dense<0.000000e+00> : vector<2x8xf32>
    %91 = vector.multi_reduction <add>, %90, %cst_30 [2] : vector<2x8x8xf32> to vector<2x8xf32>
    %92 = vector.shape_cast %91 : vector<2x8xf32> to vector<2x8x1xf32>
    %93 = tpu.reciprocal %92 {approx = true} : vector<2x8x1xf32> -> vector<2x8x1xf32>
    %94 = vector.broadcast %93 : vector<2x8x1xf32> to vector<2x8x8xf32>
    %95 = arith.mulf %90, %94 : vector<2x8x8xf32>
    %96 = vector.extract_strided_slice %7 {offsets = [2, 0, 0], sizes = [1, 1, 32], strides = [1, 1, 1]} : vector<4x1x32xf32> to vector<1x1x32xf32>
    %97 = vector.shape_cast %96 : vector<1x1x32xf32> to vector<1x32xf32>
    %98 = vector.shape_cast %97 : vector<1x32xf32> to vector<1x1x32xf32>
    %99 = vector.broadcast %98 : vector<1x1x32xf32> to vector<2x8x32xf32>
    %100 = arith.mulf %20, %99 : vector<2x8x32xf32>
    "tpu.trace_start"() <{level = 10 : i32, message = "bqk,bkd->bqd"}> : () -> ()
    %cst_31 = arith.constant dense<0.000000e+00> : vector<2x8x32xf32>
    %101 = tpu.matmul %95, %100, %cst_31 {dimension_numbers = #tpu.dot_dimension_numbers<[2], [1], [1], [2], [0, 0, 0, 1, 1, 2], [0], [0]>} : vector<2x8x8xf32>, vector<2x8x32xf32>, vector<2x8x32xf32> -> vector<2x8x32xf32>
    "tpu.trace_stop"() : () -> ()
    %102 = arith.addf %75, %101 : vector<2x8x32xf32>
    %103 = vector.extract_strided_slice %7 {offsets = [3, 0, 0], sizes = [1, 1, 32], strides = [1, 1, 1]} : vector<4x1x32xf32> to vector<1x1x32xf32>
    %104 = vector.shape_cast %103 : vector<1x1x32xf32> to vector<1x32xf32>
    %105 = vector.shape_cast %104 : vector<1x32xf32> to vector<1x1x32xf32>
    %106 = vector.broadcast %105 : vector<1x1x32xf32> to vector<2x8x32xf32>
    %107 = arith.mulf %16, %106 : vector<2x8x32xf32>
    "tpu.trace_start"() <{level = 10 : i32, message = "bqd,bkd->bqk"}> : () -> ()
    %cst_32 = arith.constant dense<0.000000e+00> : vector<2x8x8xf32>
    %108 = tpu.matmul %107, %18, %cst_32 {dimension_numbers = #tpu.dot_dimension_numbers<[2], [2], [1], [1], [0, 0, 0, 1, 1, 1], [0], [0]>} : vector<2x8x32xf32>, vector<2x8x32xf32>, vector<2x8x8xf32> -> vector<2x8x8xf32>
    "tpu.trace_stop"() : () -> ()
    %cst_33 = arith.constant 0.353553385 : f32
    %109 = vector.broadcast %cst_33 : f32 to vector<2x8x8xf32>
    %110 = arith.mulf %108, %109 : vector<2x8x8xf32>
    %111 = vector.broadcast %6 : vector<2x1x8xf32> to vector<2x8x8xf32>
    %112 = arith.addf %110, %111 : vector<2x8x8xf32>
    %cst_34 = arith.constant dense<0xFF800000> : vector<2x8xf32>
    %113 = vector.multi_reduction <maximumf>, %112, %cst_34 [2] : vector<2x8x8xf32> to vector<2x8xf32>
    %114 = vector.shape_cast %113 : vector<2x8xf32> to vector<2x8x1xf32>
    %115 = vector.broadcast %114 : vector<2x8x1xf32> to vector<2x8x8xf32>
    %116 = arith.subf %112, %115 : vector<2x8x8xf32>
    %117 = math.exp %116 : vector<2x8x8xf32>
    %cst_35 = arith.constant dense<0.000000e+00> : vector<2x8xf32>
    %118 = vector.multi_reduction <add>, %117, %cst_35 [2] : vector<2x8x8xf32> to vector<2x8xf32>
    %119 = vector.shape_cast %118 : vector<2x8xf32> to vector<2x8x1xf32>
    %120 = tpu.reciprocal %119 {approx = true} : vector<2x8x1xf32> -> vector<2x8x1xf32>
    %121 = vector.broadcast %120 : vector<2x8x1xf32> to vector<2x8x8xf32>
    %122 = arith.mulf %117, %121 : vector<2x8x8xf32>
    %123 = vector.extract_strided_slice %7 {offsets = [3, 0, 0], sizes = [1, 1, 32], strides = [1, 1, 1]} : vector<4x1x32xf32> to vector<1x1x32xf32>
    %124 = vector.shape_cast %123 : vector<1x1x32xf32> to vector<1x32xf32>
    %125 = vector.shape_cast %124 : vector<1x32xf32> to vector<1x1x32xf32>
    %126 = vector.broadcast %125 : vector<1x1x32xf32> to vector<2x8x32xf32>
    %127 = arith.mulf %20, %126 : vector<2x8x32xf32>
    "tpu.trace_start"() <{level = 10 : i32, message = "bqk,bkd->bqd"}> : () -> ()
    %cst_36 = arith.constant dense<0.000000e+00> : vector<2x8x32xf32>
    %128 = tpu.matmul %122, %127, %cst_36 {dimension_numbers = #tpu.dot_dimension_numbers<[2], [1], [1], [2], [0, 0, 0, 1, 1, 2], [0], [0]>} : vector<2x8x8xf32>, vector<2x8x32xf32>, vector<2x8x32xf32> -> vector<2x8x32xf32>
    "tpu.trace_stop"() : () -> ()
    %129 = arith.addf %102, %128 : vector<2x8x32xf32>
    %130 = vector.shape_cast %129 : vector<2x8x32xf32> to vector<16x32xf32>
    %c0_37 = arith.constant 0 : index
    %c0_38 = arith.constant 0 : index
    %c0_39 = arith.constant 0 : index
    %131 = vector.load %arg5[%c0_37, %c0_38, %c0_39] : memref<2x32x32xf32, #tpu.memory_space<vmem>>, vector<1x32x32xf32>
    %132 = vector.shape_cast %131 : vector<1x32x32xf32> to vector<32x32xf32>
    %cst_40 = arith.constant dense<0.000000e+00> : vector<16x32xf32>
    %133 = tpu.matmul %130, %132, %cst_40 {dimension_numbers = #tpu.dot_dimension_numbers<[1], [0], [0], [1], [0, 0, 1, 1], [], []>} : vector<16x32xf32>, vector<32x32xf32>, vector<16x32xf32> -> vector<16x32xf32>
    %c0_41 = arith.constant 0 : index
    %c0_42 = arith.constant 0 : index
    %c0_43 = arith.constant 0 : index
    %134 = vector.load %arg6[%c0_41, %c0_42, %c0_43] : memref<2x1x32xf32, #tpu.memory_space<vmem>>, vector<1x1x32xf32>
    %135 = vector.shape_cast %134 : vector<1x1x32xf32> to vector<1x32xf32>
    %136 = vector.broadcast %135 : vector<1x32xf32> to vector<16x32xf32>
    %137 = arith.addf %133, %136 : vector<16x32xf32>
    %138 = arith.addf %1, %137 : vector<16x32xf32>
    %cst_44 = arith.constant dense<0.000000e+00> : vector<16xf32>
    %139 = vector.multi_reduction <add>, %138, %cst_44 [1] : vector<16x32xf32> to vector<16xf32>
    %140 = vector.shape_cast %139 : vector<16xf32> to vector<16x1xf32>
    %cst_45 = arith.constant 3.200000e+01 : f32
    %141 = vector.broadcast %cst_45 : f32 to vector<16x1xf32>
    %142 = arith.divf %140, %141 : vector<16x1xf32>
    %143 = vector.broadcast %142 : vector<16x1xf32> to vector<16x32xf32>
    %144 = arith.subf %138, %143 : vector<16x32xf32>
    %145 = arith.mulf %144, %144 : vector<16x32xf32>
    %cst_46 = arith.constant dense<0.000000e+00> : vector<16xf32>
    %146 = vector.multi_reduction <add>, %145, %cst_46 [1] : vector<16x32xf32> to vector<16xf32>
    %147 = vector.shape_cast %146 : vector<16xf32> to vector<16x1xf32>
    %cst_47 = arith.constant 3.200000e+01 : f32
    %148 = vector.broadcast %cst_47 : f32 to vector<16x1xf32>
    %149 = arith.divf %147, %148 : vector<16x1xf32>
    %150 = vector.broadcast %142 : vector<16x1xf32> to vector<16x32xf32>
    %151 = arith.subf %138, %150 : vector<16x32xf32>
    %cst_48 = arith.constant 1.000000e-07 : f32
    %152 = vector.broadcast %cst_48 : f32 to vector<16x1xf32>
    %153 = arith.addf %149, %152 : vector<16x1xf32>
    %154 = math.rsqrt %153 : vector<16x1xf32>
    %155 = vector.broadcast %154 : vector<16x1xf32> to vector<16x32xf32>
    %156 = arith.mulf %151, %155 : vector<16x32xf32>
    %c0_49 = arith.constant 0 : index
    %c0_50 = arith.constant 0 : index
    %c0_51 = arith.constant 0 : index
    %157 = vector.load %arg7[%c0_49, %c0_50, %c0_51] : memref<2x1x32xf32, #tpu.memory_space<vmem>>, vector<1x1x32xf32>
    %158 = vector.shape_cast %157 : vector<1x1x32xf32> to vector<1x32xf32>
    %159 = vector.broadcast %158 : vector<1x32xf32> to vector<16x32xf32>
    %160 = arith.mulf %156, %159 : vector<16x32xf32>
    %c0_52 = arith.constant 0 : index
    %c0_53 = arith.constant 0 : index
    %c0_54 = arith.constant 0 : index
    %161 = vector.load %arg8[%c0_52, %c0_53, %c0_54] : memref<2x1x32xf32, #tpu.memory_space<vmem>>, vector<1x1x32xf32>
    %162 = vector.shape_cast %161 : vector<1x1x32xf32> to vector<1x32xf32>
    %163 = vector.broadcast %162 : vector<1x32xf32> to vector<16x32xf32>
    %164 = arith.addf %160, %163 : vector<16x32xf32>
    %c0_55 = arith.constant 0 : index
    %c0_56 = arith.constant 0 : index
    %c0_57 = arith.constant 0 : index
    %165 = vector.load %arg9[%c0_55, %c0_56, %c0_57] : memref<2x32x64xf32, #tpu.memory_space<vmem>>, vector<1x32x64xf32>
    %166 = vector.shape_cast %165 : vector<1x32x64xf32> to vector<32x64xf32>
    %cst_58 = arith.constant dense<0.000000e+00> : vector<16x64xf32>
    %167 = tpu.matmul %164, %166, %cst_58 {dimension_numbers = #tpu.dot_dimension_numbers<[1], [0], [0], [1], [0, 0, 1, 1], [], []>} : vector<16x32xf32>, vector<32x64xf32>, vector<16x64xf32> -> vector<16x64xf32>
    %c0_59 = arith.constant 0 : index
    %c0_60 = arith.constant 0 : index
    %c0_61 = arith.constant 0 : index
    %168 = vector.load %arg10[%c0_59, %c0_60, %c0_61] : memref<2x1x64xf32, #tpu.memory_space<vmem>>, vector<1x1x64xf32>
    %169 = vector.shape_cast %168 : vector<1x1x64xf32> to vector<1x64xf32>
    %170 = vector.broadcast %169 : vector<1x64xf32> to vector<16x64xf32>
    %171 = arith.addf %167, %170 : vector<16x64xf32>
    %172 = arith.mulf %171, %171 : vector<16x64xf32>
    %173 = arith.mulf %171, %172 : vector<16x64xf32>
    %cst_62 = arith.constant 4.471500e-02 : f32
    %174 = vector.broadcast %cst_62 : f32 to vector<16x64xf32>
    %175 = arith.mulf %174, %173 : vector<16x64xf32>
    %176 = arith.addf %171, %175 : vector<16x64xf32>
    %cst_63 = arith.constant 0.797884583 : f32
    %177 = vector.broadcast %cst_63 : f32 to vector<16x64xf32>
    %178 = arith.mulf %177, %176 : vector<16x64xf32>
    %179 = math.tanh %178 : vector<16x64xf32>
    %cst_64 = arith.constant 1.000000e+00 : f32
    %180 = vector.broadcast %cst_64 : f32 to vector<16x64xf32>
    %181 = arith.addf %180, %179 : vector<16x64xf32>
    %cst_65 = arith.constant 5.000000e-01 : f32
    %182 = vector.broadcast %cst_65 : f32 to vector<16x64xf32>
    %183 = arith.mulf %182, %181 : vector<16x64xf32>
    %184 = arith.mulf %171, %183 : vector<16x64xf32>
    %c0_66 = arith.constant 0 : index
    %c0_67 = arith.constant 0 : index
    %c0_68 = arith.constant 0 : index
    %185 = vector.load %arg11[%c0_66, %c0_67, %c0_68] : memref<2x64x32xf32, #tpu.memory_space<vmem>>, vector<1x64x32xf32>
    %186 = vector.shape_cast %185 : vector<1x64x32xf32> to vector<64x32xf32>
    %cst_69 = arith.constant dense<0.000000e+00> : vector<16x32xf32>
    %187 = tpu.matmul %184, %186, %cst_69 {dimension_numbers = #tpu.dot_dimension_numbers<[1], [0], [0], [1], [0, 0, 1, 1], [], []>} : vector<16x64xf32>, vector<64x32xf32>, vector<16x32xf32> -> vector<16x32xf32>
    %c0_70 = arith.constant 0 : index
    %c0_71 = arith.constant 0 : index
    %c0_72 = arith.constant 0 : index
    %188 = vector.load %arg12[%c0_70, %c0_71, %c0_72] : memref<2x1x32xf32, #tpu.memory_space<vmem>>, vector<1x1x32xf32>
    %189 = vector.shape_cast %188 : vector<1x1x32xf32> to vector<1x32xf32>
    %190 = vector.broadcast %189 : vector<1x32xf32> to vector<16x32xf32>
    %191 = arith.addf %187, %190 : vector<16x32xf32>
    %192 = arith.addf %164, %191 : vector<16x32xf32>
    %cst_73 = arith.constant dense<0.000000e+00> : vector<16xf32>
    %193 = vector.multi_reduction <add>, %192, %cst_73 [1] : vector<16x32xf32> to vector<16xf32>
    %194 = vector.shape_cast %193 : vector<16xf32> to vector<16x1xf32>
    %cst_74 = arith.constant 3.200000e+01 : f32
    %195 = vector.broadcast %cst_74 : f32 to vector<16x1xf32>
    %196 = arith.divf %194, %195 : vector<16x1xf32>
    %197 = vector.broadcast %196 : vector<16x1xf32> to vector<16x32xf32>
    %198 = arith.subf %192, %197 : vector<16x32xf32>
    %199 = arith.mulf %198, %198 : vector<16x32xf32>
    %cst_75 = arith.constant dense<0.000000e+00> : vector<16xf32>
    %200 = vector.multi_reduction <add>, %199, %cst_75 [1] : vector<16x32xf32> to vector<16xf32>
    %201 = vector.shape_cast %200 : vector<16xf32> to vector<16x1xf32>
    %cst_76 = arith.constant 3.200000e+01 : f32
    %202 = vector.broadcast %cst_76 : f32 to vector<16x1xf32>
    %203 = arith.divf %201, %202 : vector<16x1xf32>
    %204 = vector.broadcast %196 : vector<16x1xf32> to vector<16x32xf32>
    %205 = arith.subf %192, %204 : vector<16x32xf32>
    %cst_77 = arith.constant 1.000000e-07 : f32
    %206 = vector.broadcast %cst_77 : f32 to vector<16x1xf32>
    %207 = arith.addf %203, %206 : vector<16x1xf32>
    %208 = math.rsqrt %207 : vector<16x1xf32>
    %209 = vector.broadcast %208 : vector<16x1xf32> to vector<16x32xf32>
    %210 = arith.mulf %205, %209 : vector<16x32xf32>
    %c0_78 = arith.constant 0 : index
    %c0_79 = arith.constant 0 : index
    %c0_80 = arith.constant 0 : index
    %211 = vector.load %arg13[%c0_78, %c0_79, %c0_80] : memref<2x1x32xf32, #tpu.memory_space<vmem>>, vector<1x1x32xf32>
    %212 = vector.shape_cast %211 : vector<1x1x32xf32> to vector<1x32xf32>
    %213 = vector.broadcast %212 : vector<1x32xf32> to vector<16x32xf32>
    %214 = arith.mulf %210, %213 : vector<16x32xf32>
    %c0_81 = arith.constant 0 : index
    %c0_82 = arith.constant 0 : index
    %c0_83 = arith.constant 0 : index
    %215 = vector.load %arg14[%c0_81, %c0_82, %c0_83] : memref<2x1x32xf32, #tpu.memory_space<vmem>>, vector<1x1x32xf32>
    %216 = vector.shape_cast %215 : vector<1x1x32xf32> to vector<1x32xf32>
    %217 = vector.broadcast %216 : vector<1x32xf32> to vector<16x32xf32>
    %218 = arith.addf %214, %217 : vector<16x32xf32>
    %c1 = arith.constant 1 : index
    %c0_84 = arith.constant 0 : index
    %c0_85 = arith.constant 0 : index
    %219 = vector.load %arg3[%c1, %c0_84, %c0_85] : memref<2x32x96xf32, #tpu.memory_space<vmem>>, vector<1x32x96xf32>
    %220 = vector.shape_cast %219 : vector<1x32x96xf32> to vector<32x96xf32>
    %cst_86 = arith.constant dense<0.000000e+00> : vector<16x96xf32>
    %221 = tpu.matmul %218, %220, %cst_86 {dimension_numbers = #tpu.dot_dimension_numbers<[1], [0], [0], [1], [0, 0, 1, 1], [], []>} : vector<16x32xf32>, vector<32x96xf32>, vector<16x96xf32> -> vector<16x96xf32>
    %c1_87 = arith.constant 1 : index
    %c0_88 = arith.constant 0 : index
    %c0_89 = arith.constant 0 : index
    %222 = vector.load %arg4[%c1_87, %c0_88, %c0_89] : memref<2x1x96xf32, #tpu.memory_space<vmem>>, vector<1x1x96xf32>
    %223 = vector.shape_cast %222 : vector<1x1x96xf32> to vector<1x96xf32>
    %224 = vector.broadcast %223 : vector<1x96xf32> to vector<16x96xf32>
    %225 = arith.addf %221, %224 : vector<16x96xf32>
    %226 = vector.extract_strided_slice %225 {offsets = [0, 0], sizes = [16, 32], strides = [1, 1]} : vector<16x96xf32> to vector<16x32xf32>
    %227 = vector.shape_cast %226 : vector<16x32xf32> to vector<2x8x32xf32>
    %228 = vector.extract_strided_slice %225 {offsets = [0, 32], sizes = [16, 32], strides = [1, 1]} : vector<16x96xf32> to vector<16x32xf32>
    %229 = vector.shape_cast %228 : vector<16x32xf32> to vector<2x8x32xf32>
    %230 = vector.extract_strided_slice %225 {offsets = [0, 64], sizes = [16, 32], strides = [1, 1]} : vector<16x96xf32> to vector<16x32xf32>
    %231 = vector.shape_cast %230 : vector<16x32xf32> to vector<2x8x32xf32>
    %cst_90 = arith.constant 0.000000e+00 : f32
    %232 = vector.broadcast %cst_90 : f32 to vector<2x8x32xf32>
    %233 = vector.extract_strided_slice %7 {offsets = [0, 0, 0], sizes = [1, 1, 32], strides = [1, 1, 1]} : vector<4x1x32xf32> to vector<1x1x32xf32>
    %234 = vector.shape_cast %233 : vector<1x1x32xf32> to vector<1x32xf32>
    %235 = vector.shape_cast %234 : vector<1x32xf32> to vector<1x1x32xf32>
    %236 = vector.broadcast %235 : vector<1x1x32xf32> to vector<2x8x32xf32>
    %237 = arith.mulf %227, %236 : vector<2x8x32xf32>
    "tpu.trace_start"() <{level = 10 : i32, message = "bqd,bkd->bqk"}> : () -> ()
    %cst_91 = arith.constant dense<0.000000e+00> : vector<2x8x8xf32>
    %238 = tpu.matmul %237, %229, %cst_91 {dimension_numbers = #tpu.dot_dimension_numbers<[2], [2], [1], [1], [0, 0, 0, 1, 1, 1], [0], [0]>} : vector<2x8x32xf32>, vector<2x8x32xf32>, vector<2x8x8xf32> -> vector<2x8x8xf32>
    "tpu.trace_stop"() : () -> ()
    %cst_92 = arith.constant 0.353553385 : f32
    %239 = vector.broadcast %cst_92 : f32 to vector<2x8x8xf32>
    %240 = arith.mulf %238, %239 : vector<2x8x8xf32>
    %241 = vector.broadcast %6 : vector<2x1x8xf32> to vector<2x8x8xf32>
    %242 = arith.addf %240, %241 : vector<2x8x8xf32>
    %cst_93 = arith.constant dense<0xFF800000> : vector<2x8xf32>
    %243 = vector.multi_reduction <maximumf>, %242, %cst_93 [2] : vector<2x8x8xf32> to vector<2x8xf32>
    %244 = vector.shape_cast %243 : vector<2x8xf32> to vector<2x8x1xf32>
    %245 = vector.broadcast %244 : vector<2x8x1xf32> to vector<2x8x8xf32>
    %246 = arith.subf %242, %245 : vector<2x8x8xf32>
    %247 = math.exp %246 : vector<2x8x8xf32>
    %cst_94 = arith.constant dense<0.000000e+00> : vector<2x8xf32>
    %248 = vector.multi_reduction <add>, %247, %cst_94 [2] : vector<2x8x8xf32> to vector<2x8xf32>
    %249 = vector.shape_cast %248 : vector<2x8xf32> to vector<2x8x1xf32>
    %250 = tpu.reciprocal %249 {approx = true} : vector<2x8x1xf32> -> vector<2x8x1xf32>
    %251 = vector.broadcast %250 : vector<2x8x1xf32> to vector<2x8x8xf32>
    %252 = arith.mulf %247, %251 : vector<2x8x8xf32>
    %253 = vector.extract_strided_slice %7 {offsets = [0, 0, 0], sizes = [1, 1, 32], strides = [1, 1, 1]} : vector<4x1x32xf32> to vector<1x1x32xf32>
    %254 = vector.shape_cast %253 : vector<1x1x32xf32> to vector<1x32xf32>
    %255 = vector.shape_cast %254 : vector<1x32xf32> to vector<1x1x32xf32>
    %256 = vector.broadcast %255 : vector<1x1x32xf32> to vector<2x8x32xf32>
    %257 = arith.mulf %231, %256 : vector<2x8x32xf32>
    "tpu.trace_start"() <{level = 10 : i32, message = "bqk,bkd->bqd"}> : () -> ()
    %cst_95 = arith.constant dense<0.000000e+00> : vector<2x8x32xf32>
    %258 = tpu.matmul %252, %257, %cst_95 {dimension_numbers = #tpu.dot_dimension_numbers<[2], [1], [1], [2], [0, 0, 0, 1, 1, 2], [0], [0]>} : vector<2x8x8xf32>, vector<2x8x32xf32>, vector<2x8x32xf32> -> vector<2x8x32xf32>
    "tpu.trace_stop"() : () -> ()
    %259 = arith.addf %232, %258 : vector<2x8x32xf32>
    %260 = vector.extract_strided_slice %7 {offsets = [1, 0, 0], sizes = [1, 1, 32], strides = [1, 1, 1]} : vector<4x1x32xf32> to vector<1x1x32xf32>
    %261 = vector.shape_cast %260 : vector<1x1x32xf32> to vector<1x32xf32>
    %262 = vector.shape_cast %261 : vector<1x32xf32> to vector<1x1x32xf32>
    %263 = vector.broadcast %262 : vector<1x1x32xf32> to vector<2x8x32xf32>
    %264 = arith.mulf %227, %263 : vector<2x8x32xf32>
    "tpu.trace_start"() <{level = 10 : i32, message = "bqd,bkd->bqk"}> : () -> ()
    %cst_96 = arith.constant dense<0.000000e+00> : vector<2x8x8xf32>
    %265 = tpu.matmul %264, %229, %cst_96 {dimension_numbers = #tpu.dot_dimension_numbers<[2], [2], [1], [1], [0, 0, 0, 1, 1, 1], [0], [0]>} : vector<2x8x32xf32>, vector<2x8x32xf32>, vector<2x8x8xf32> -> vector<2x8x8xf32>
    "tpu.trace_stop"() : () -> ()
    %cst_97 = arith.constant 0.353553385 : f32
    %266 = vector.broadcast %cst_97 : f32 to vector<2x8x8xf32>
    %267 = arith.mulf %265, %266 : vector<2x8x8xf32>
    %268 = vector.broadcast %6 : vector<2x1x8xf32> to vector<2x8x8xf32>
    %269 = arith.addf %267, %268 : vector<2x8x8xf32>
    %cst_98 = arith.constant dense<0xFF800000> : vector<2x8xf32>
    %270 = vector.multi_reduction <maximumf>, %269, %cst_98 [2] : vector<2x8x8xf32> to vector<2x8xf32>
    %271 = vector.shape_cast %270 : vector<2x8xf32> to vector<2x8x1xf32>
    %272 = vector.broadcast %271 : vector<2x8x1xf32> to vector<2x8x8xf32>
    %273 = arith.subf %269, %272 : vector<2x8x8xf32>
    %274 = math.exp %273 : vector<2x8x8xf32>
    %cst_99 = arith.constant dense<0.000000e+00> : vector<2x8xf32>
    %275 = vector.multi_reduction <add>, %274, %cst_99 [2] : vector<2x8x8xf32> to vector<2x8xf32>
    %276 = vector.shape_cast %275 : vector<2x8xf32> to vector<2x8x1xf32>
    %277 = tpu.reciprocal %276 {approx = true} : vector<2x8x1xf32> -> vector<2x8x1xf32>
    %278 = vector.broadcast %277 : vector<2x8x1xf32> to vector<2x8x8xf32>
    %279 = arith.mulf %274, %278 : vector<2x8x8xf32>
    %280 = vector.extract_strided_slice %7 {offsets = [1, 0, 0], sizes = [1, 1, 32], strides = [1, 1, 1]} : vector<4x1x32xf32> to vector<1x1x32xf32>
    %281 = vector.shape_cast %280 : vector<1x1x32xf32> to vector<1x32xf32>
    %282 = vector.shape_cast %281 : vector<1x32xf32> to vector<1x1x32xf32>
    %283 = vector.broadcast %282 : vector<1x1x32xf32> to vector<2x8x32xf32>
    %284 = arith.mulf %231, %283 : vector<2x8x32xf32>
    "tpu.trace_start"() <{level = 10 : i32, message = "bqk,bkd->bqd"}> : () -> ()
    %cst_100 = arith.constant dense<0.000000e+00> : vector<2x8x32xf32>
    %285 = tpu.matmul %279, %284, %cst_100 {dimension_numbers = #tpu.dot_dimension_numbers<[2], [1], [1], [2], [0, 0, 0, 1, 1, 2], [0], [0]>} : vector<2x8x8xf32>, vector<2x8x32xf32>, vector<2x8x32xf32> -> vector<2x8x32xf32>
    "tpu.trace_stop"() : () -> ()
    %286 = arith.addf %259, %285 : vector<2x8x32xf32>
    %287 = vector.extract_strided_slice %7 {offsets = [2, 0, 0], sizes = [1, 1, 32], strides = [1, 1, 1]} : vector<4x1x32xf32> to vector<1x1x32xf32>
    %288 = vector.shape_cast %287 : vector<1x1x32xf32> to vector<1x32xf32>
    %289 = vector.shape_cast %288 : vector<1x32xf32> to vector<1x1x32xf32>
    %290 = vector.broadcast %289 : vector<1x1x32xf32> to vector<2x8x32xf32>
    %291 = arith.mulf %227, %290 : vector<2x8x32xf32>
    "tpu.trace_start"() <{level = 10 : i32, message = "bqd,bkd->bqk"}> : () -> ()
    %cst_101 = arith.constant dense<0.000000e+00> : vector<2x8x8xf32>
    %292 = tpu.matmul %291, %229, %cst_101 {dimension_numbers = #tpu.dot_dimension_numbers<[2], [2], [1], [1], [0, 0, 0, 1, 1, 1], [0], [0]>} : vector<2x8x32xf32>, vector<2x8x32xf32>, vector<2x8x8xf32> -> vector<2x8x8xf32>
    "tpu.trace_stop"() : () -> ()
    %cst_102 = arith.constant 0.353553385 : f32
    %293 = vector.broadcast %cst_102 : f32 to vector<2x8x8xf32>
    %294 = arith.mulf %292, %293 : vector<2x8x8xf32>
    %295 = vector.broadcast %6 : vector<2x1x8xf32> to vector<2x8x8xf32>
    %296 = arith.addf %294, %295 : vector<2x8x8xf32>
    %cst_103 = arith.constant dense<0xFF800000> : vector<2x8xf32>
    %297 = vector.multi_reduction <maximumf>, %296, %cst_103 [2] : vector<2x8x8xf32> to vector<2x8xf32>
    %298 = vector.shape_cast %297 : vector<2x8xf32> to vector<2x8x1xf32>
    %299 = vector.broadcast %298 : vector<2x8x1xf32> to vector<2x8x8xf32>
    %300 = arith.subf %296, %299 : vector<2x8x8xf32>
    %301 = math.exp %300 : vector<2x8x8xf32>
    %cst_104 = arith.constant dense<0.000000e+00> : vector<2x8xf32>
    %302 = vector.multi_reduction <add>, %301, %cst_104 [2] : vector<2x8x8xf32> to vector<2x8xf32>
    %303 = vector.shape_cast %302 : vector<2x8xf32> to vector<2x8x1xf32>
    %304 = tpu.reciprocal %303 {approx = true} : vector<2x8x1xf32> -> vector<2x8x1xf32>
    %305 = vector.broadcast %304 : vector<2x8x1xf32> to vector<2x8x8xf32>
    %306 = arith.mulf %301, %305 : vector<2x8x8xf32>
    %307 = vector.extract_strided_slice %7 {offsets = [2, 0, 0], sizes = [1, 1, 32], strides = [1, 1, 1]} : vector<4x1x32xf32> to vector<1x1x32xf32>
    %308 = vector.shape_cast %307 : vector<1x1x32xf32> to vector<1x32xf32>
    %309 = vector.shape_cast %308 : vector<1x32xf32> to vector<1x1x32xf32>
    %310 = vector.broadcast %309 : vector<1x1x32xf32> to vector<2x8x32xf32>
    %311 = arith.mulf %231, %310 : vector<2x8x32xf32>
    "tpu.trace_start"() <{level = 10 : i32, message = "bqk,bkd->bqd"}> : () -> ()
    %cst_105 = arith.constant dense<0.000000e+00> : vector<2x8x32xf32>
    %312 = tpu.matmul %306, %311, %cst_105 {dimension_numbers = #tpu.dot_dimension_numbers<[2], [1], [1], [2], [0, 0, 0, 1, 1, 2], [0], [0]>} : vector<2x8x8xf32>, vector<2x8x32xf32>, vector<2x8x32xf32> -> vector<2x8x32xf32>
    "tpu.trace_stop"() : () -> ()
    %313 = arith.addf %286, %312 : vector<2x8x32xf32>
    %314 = vector.extract_strided_slice %7 {offsets = [3, 0, 0], sizes = [1, 1, 32], strides = [1, 1, 1]} : vector<4x1x32xf32> to vector<1x1x32xf32>
    %315 = vector.shape_cast %314 : vector<1x1x32xf32> to vector<1x32xf32>
    %316 = vector.shape_cast %315 : vector<1x32xf32> to vector<1x1x32xf32>
    %317 = vector.broadcast %316 : vector<1x1x32xf32> to vector<2x8x32xf32>
    %318 = arith.mulf %227, %317 : vector<2x8x32xf32>
    "tpu.trace_start"() <{level = 10 : i32, message = "bqd,bkd->bqk"}> : () -> ()
    %cst_106 = arith.constant dense<0.000000e+00> : vector<2x8x8xf32>
    %319 = tpu.matmul %318, %229, %cst_106 {dimension_numbers = #tpu.dot_dimension_numbers<[2], [2], [1], [1], [0, 0, 0, 1, 1, 1], [0], [0]>} : vector<2x8x32xf32>, vector<2x8x32xf32>, vector<2x8x8xf32> -> vector<2x8x8xf32>
    "tpu.trace_stop"() : () -> ()
    %cst_107 = arith.constant 0.353553385 : f32
    %320 = vector.broadcast %cst_107 : f32 to vector<2x8x8xf32>
    %321 = arith.mulf %319, %320 : vector<2x8x8xf32>
    %322 = vector.broadcast %6 : vector<2x1x8xf32> to vector<2x8x8xf32>
    %323 = arith.addf %321, %322 : vector<2x8x8xf32>
    %cst_108 = arith.constant dense<0xFF800000> : vector<2x8xf32>
    %324 = vector.multi_reduction <maximumf>, %323, %cst_108 [2] : vector<2x8x8xf32> to vector<2x8xf32>
    %325 = vector.shape_cast %324 : vector<2x8xf32> to vector<2x8x1xf32>
    %326 = vector.broadcast %325 : vector<2x8x1xf32> to vector<2x8x8xf32>
    %327 = arith.subf %323, %326 : vector<2x8x8xf32>
    %328 = math.exp %327 : vector<2x8x8xf32>
    %cst_109 = arith.constant dense<0.000000e+00> : vector<2x8xf32>
    %329 = vector.multi_reduction <add>, %328, %cst_109 [2] : vector<2x8x8xf32> to vector<2x8xf32>
    %330 = vector.shape_cast %329 : vector<2x8xf32> to vector<2x8x1xf32>
    %331 = tpu.reciprocal %330 {approx = true} : vector<2x8x1xf32> -> vector<2x8x1xf32>
    %332 = vector.broadcast %331 : vector<2x8x1xf32> to vector<2x8x8xf32>
    %333 = arith.mulf %328, %332 : vector<2x8x8xf32>
    %334 = vector.extract_strided_slice %7 {offsets = [3, 0, 0], sizes = [1, 1, 32], strides = [1, 1, 1]} : vector<4x1x32xf32> to vector<1x1x32xf32>
    %335 = vector.shape_cast %334 : vector<1x1x32xf32> to vector<1x32xf32>
    %336 = vector.shape_cast %335 : vector<1x32xf32> to vector<1x1x32xf32>
    %337 = vector.broadcast %336 : vector<1x1x32xf32> to vector<2x8x32xf32>
    %338 = arith.mulf %231, %337 : vector<2x8x32xf32>
    "tpu.trace_start"() <{level = 10 : i32, message = "bqk,bkd->bqd"}> : () -> ()
    %cst_110 = arith.constant dense<0.000000e+00> : vector<2x8x32xf32>
    %339 = tpu.matmul %333, %338, %cst_110 {dimension_numbers = #tpu.dot_dimension_numbers<[2], [1], [1], [2], [0, 0, 0, 1, 1, 2], [0], [0]>} : vector<2x8x8xf32>, vector<2x8x32xf32>, vector<2x8x32xf32> -> vector<2x8x32xf32>
    "tpu.trace_stop"() : () -> ()
    %340 = arith.addf %313, %339 : vector<2x8x32xf32>
    %341 = vector.shape_cast %340 : vector<2x8x32xf32> to vector<16x32xf32>
    %c1_111 = arith.constant 1 : index
    %c0_112 = arith.constant 0 : index
    %c0_113 = arith.constant 0 : index
    %342 = vector.load %arg5[%c1_111, %c0_112, %c0_113] : memref<2x32x32xf32, #tpu.memory_space<vmem>>, vector<1x32x32xf32>
    %343 = vector.shape_cast %342 : vector<1x32x32xf32> to vector<32x32xf32>
    %cst_114 = arith.constant dense<0.000000e+00> : vector<16x32xf32>
    %344 = tpu.matmul %341, %343, %cst_114 {dimension_numbers = #tpu.dot_dimension_numbers<[1], [0], [0], [1], [0, 0, 1, 1], [], []>} : vector<16x32xf32>, vector<32x32xf32>, vector<16x32xf32> -> vector<16x32xf32>
    %c1_115 = arith.constant 1 : index
    %c0_116 = arith.constant 0 : index
    %c0_117 = arith.constant 0 : index
    %345 = vector.load %arg6[%c1_115, %c0_116, %c0_117] : memref<2x1x32xf32, #tpu.memory_space<vmem>>, vector<1x1x32xf32>
    %346 = vector.shape_cast %345 : vector<1x1x32xf32> to vector<1x32xf32>
    %347 = vector.broadcast %346 : vector<1x32xf32> to vector<16x32xf32>
    %348 = arith.addf %344, %347 : vector<16x32xf32>
    %349 = arith.addf %218, %348 : vector<16x32xf32>
    %cst_118 = arith.constant dense<0.000000e+00> : vector<16xf32>
    %350 = vector.multi_reduction <add>, %349, %cst_118 [1] : vector<16x32xf32> to vector<16xf32>
    %351 = vector.shape_cast %350 : vector<16xf32> to vector<16x1xf32>
    %cst_119 = arith.constant 3.200000e+01 : f32
    %352 = vector.broadcast %cst_119 : f32 to vector<16x1xf32>
    %353 = arith.divf %351, %352 : vector<16x1xf32>
    %354 = vector.broadcast %353 : vector<16x1xf32> to vector<16x32xf32>
    %355 = arith.subf %349, %354 : vector<16x32xf32>
    %356 = arith.mulf %355, %355 : vector<16x32xf32>
    %cst_120 = arith.constant dense<0.000000e+00> : vector<16xf32>
    %357 = vector.multi_reduction <add>, %356, %cst_120 [1] : vector<16x32xf32> to vector<16xf32>
    %358 = vector.shape_cast %357 : vector<16xf32> to vector<16x1xf32>
    %cst_121 = arith.constant 3.200000e+01 : f32
    %359 = vector.broadcast %cst_121 : f32 to vector<16x1xf32>
    %360 = arith.divf %358, %359 : vector<16x1xf32>
    %361 = vector.broadcast %353 : vector<16x1xf32> to vector<16x32xf32>
    %362 = arith.subf %349, %361 : vector<16x32xf32>
    %cst_122 = arith.constant 1.000000e-07 : f32
    %363 = vector.broadcast %cst_122 : f32 to vector<16x1xf32>
    %364 = arith.addf %360, %363 : vector<16x1xf32>
    %365 = math.rsqrt %364 : vector<16x1xf32>
    %366 = vector.broadcast %365 : vector<16x1xf32> to vector<16x32xf32>
    %367 = arith.mulf %362, %366 : vector<16x32xf32>
    %c1_123 = arith.constant 1 : index
    %c0_124 = arith.constant 0 : index
    %c0_125 = arith.constant 0 : index
    %368 = vector.load %arg7[%c1_123, %c0_124, %c0_125] : memref<2x1x32xf32, #tpu.memory_space<vmem>>, vector<1x1x32xf32>
    %369 = vector.shape_cast %368 : vector<1x1x32xf32> to vector<1x32xf32>
    %370 = vector.broadcast %369 : vector<1x32xf32> to vector<16x32xf32>
    %371 = arith.mulf %367, %370 : vector<16x32xf32>
    %c1_126 = arith.constant 1 : index
    %c0_127 = arith.constant 0 : index
    %c0_128 = arith.constant 0 : index
    %372 = vector.load %arg8[%c1_126, %c0_127, %c0_128] : memref<2x1x32xf32, #tpu.memory_space<vmem>>, vector<1x1x32xf32>
    %373 = vector.shape_cast %372 : vector<1x1x32xf32> to vector<1x32xf32>
    %374 = vector.broadcast %373 : vector<1x32xf32> to vector<16x32xf32>
    %375 = arith.addf %371, %374 : vector<16x32xf32>
    %c1_129 = arith.constant 1 : index
    %c0_130 = arith.constant 0 : index
    %c0_131 = arith.constant 0 : index
    %376 = vector.load %arg9[%c1_129, %c0_130, %c0_131] : memref<2x32x64xf32, #tpu.memory_space<vmem>>, vector<1x32x64xf32>
    %377 = vector.shape_cast %376 : vector<1x32x64xf32> to vector<32x64xf32>
    %cst_132 = arith.constant dense<0.000000e+00> : vector<16x64xf32>
    %378 = tpu.matmul %375, %377, %cst_132 {dimension_numbers = #tpu.dot_dimension_numbers<[1], [0], [0], [1], [0, 0, 1, 1], [], []>} : vector<16x32xf32>, vector<32x64xf32>, vector<16x64xf32> -> vector<16x64xf32>
    %c1_133 = arith.constant 1 : index
    %c0_134 = arith.constant 0 : index
    %c0_135 = arith.constant 0 : index
    %379 = vector.load %arg10[%c1_133, %c0_134, %c0_135] : memref<2x1x64xf32, #tpu.memory_space<vmem>>, vector<1x1x64xf32>
    %380 = vector.shape_cast %379 : vector<1x1x64xf32> to vector<1x64xf32>
    %381 = vector.broadcast %380 : vector<1x64xf32> to vector<16x64xf32>
    %382 = arith.addf %378, %381 : vector<16x64xf32>
    %383 = arith.mulf %382, %382 : vector<16x64xf32>
    %384 = arith.mulf %382, %383 : vector<16x64xf32>
    %cst_136 = arith.constant 4.471500e-02 : f32
    %385 = vector.broadcast %cst_136 : f32 to vector<16x64xf32>
    %386 = arith.mulf %385, %384 : vector<16x64xf32>
    %387 = arith.addf %382, %386 : vector<16x64xf32>
    %cst_137 = arith.constant 0.797884583 : f32
    %388 = vector.broadcast %cst_137 : f32 to vector<16x64xf32>
    %389 = arith.mulf %388, %387 : vector<16x64xf32>
    %390 = math.tanh %389 : vector<16x64xf32>
    %cst_138 = arith.constant 1.000000e+00 : f32
    %391 = vector.broadcast %cst_138 : f32 to vector<16x64xf32>
    %392 = arith.addf %391, %390 : vector<16x64xf32>
    %cst_139 = arith.constant 5.000000e-01 : f32
    %393 = vector.broadcast %cst_139 : f32 to vector<16x64xf32>
    %394 = arith.mulf %393, %392 : vector<16x64xf32>
    %395 = arith.mulf %382, %394 : vector<16x64xf32>
    %c1_140 = arith.constant 1 : index
    %c0_141 = arith.constant 0 : index
    %c0_142 = arith.constant 0 : index
    %396 = vector.load %arg11[%c1_140, %c0_141, %c0_142] : memref<2x64x32xf32, #tpu.memory_space<vmem>>, vector<1x64x32xf32>
    %397 = vector.shape_cast %396 : vector<1x64x32xf32> to vector<64x32xf32>
    %cst_143 = arith.constant dense<0.000000e+00> : vector<16x32xf32>
    %398 = tpu.matmul %395, %397, %cst_143 {dimension_numbers = #tpu.dot_dimension_numbers<[1], [0], [0], [1], [0, 0, 1, 1], [], []>} : vector<16x64xf32>, vector<64x32xf32>, vector<16x32xf32> -> vector<16x32xf32>
    %c1_144 = arith.constant 1 : index
    %c0_145 = arith.constant 0 : index
    %c0_146 = arith.constant 0 : index
    %399 = vector.load %arg12[%c1_144, %c0_145, %c0_146] : memref<2x1x32xf32, #tpu.memory_space<vmem>>, vector<1x1x32xf32>
    %400 = vector.shape_cast %399 : vector<1x1x32xf32> to vector<1x32xf32>
    %401 = vector.broadcast %400 : vector<1x32xf32> to vector<16x32xf32>
    %402 = arith.addf %398, %401 : vector<16x32xf32>
    %403 = arith.addf %375, %402 : vector<16x32xf32>
    %cst_147 = arith.constant dense<0.000000e+00> : vector<16xf32>
    %404 = vector.multi_reduction <add>, %403, %cst_147 [1] : vector<16x32xf32> to vector<16xf32>
    %405 = vector.shape_cast %404 : vector<16xf32> to vector<16x1xf32>
    %cst_148 = arith.constant 3.200000e+01 : f32
    %406 = vector.broadcast %cst_148 : f32 to vector<16x1xf32>
    %407 = arith.divf %405, %406 : vector<16x1xf32>
    %408 = vector.broadcast %407 : vector<16x1xf32> to vector<16x32xf32>
    %409 = arith.subf %403, %408 : vector<16x32xf32>
    %410 = arith.mulf %409, %409 : vector<16x32xf32>
    %cst_149 = arith.constant dense<0.000000e+00> : vector<16xf32>
    %411 = vector.multi_reduction <add>, %410, %cst_149 [1] : vector<16x32xf32> to vector<16xf32>
    %412 = vector.shape_cast %411 : vector<16xf32> to vector<16x1xf32>
    %cst_150 = arith.constant 3.200000e+01 : f32
    %413 = vector.broadcast %cst_150 : f32 to vector<16x1xf32>
    %414 = arith.divf %412, %413 : vector<16x1xf32>
    %415 = vector.broadcast %407 : vector<16x1xf32> to vector<16x32xf32>
    %416 = arith.subf %403, %415 : vector<16x32xf32>
    %cst_151 = arith.constant 1.000000e-07 : f32
    %417 = vector.broadcast %cst_151 : f32 to vector<16x1xf32>
    %418 = arith.addf %414, %417 : vector<16x1xf32>
    %419 = math.rsqrt %418 : vector<16x1xf32>
    %420 = vector.broadcast %419 : vector<16x1xf32> to vector<16x32xf32>
    %421 = arith.mulf %416, %420 : vector<16x32xf32>
    %c1_152 = arith.constant 1 : index
    %c0_153 = arith.constant 0 : index
    %c0_154 = arith.constant 0 : index
    %422 = vector.load %arg13[%c1_152, %c0_153, %c0_154] : memref<2x1x32xf32, #tpu.memory_space<vmem>>, vector<1x1x32xf32>
    %423 = vector.shape_cast %422 : vector<1x1x32xf32> to vector<1x32xf32>
    %424 = vector.broadcast %423 : vector<1x32xf32> to vector<16x32xf32>
    %425 = arith.mulf %421, %424 : vector<16x32xf32>
    %c1_155 = arith.constant 1 : index
    %c0_156 = arith.constant 0 : index
    %c0_157 = arith.constant 0 : index
    %426 = vector.load %arg14[%c1_155, %c0_156, %c0_157] : memref<2x1x32xf32, #tpu.memory_space<vmem>>, vector<1x1x32xf32>
    %427 = vector.shape_cast %426 : vector<1x1x32xf32> to vector<1x32xf32>
    %428 = vector.broadcast %427 : vector<1x32xf32> to vector<16x32xf32>
    %429 = arith.addf %425, %428 : vector<16x32xf32>
    %430 = vector.shape_cast %429 : vector<16x32xf32> to vector<2x8x32xf32>
    %431 = vector.extract_strided_slice %430 {offsets = [0, 0, 0], sizes = [2, 1, 32], strides = [1, 1, 1]} : vector<2x8x32xf32> to vector<2x1x32xf32>
    %432 = vector.shape_cast %431 : vector<2x1x32xf32> to vector<2x32xf32>
    %c0_158 = arith.constant 0 : index
    %c0_159 = arith.constant 0 : index
    %433 = vector.load %arg15[%c0_158, %c0_159] : memref<1x32xf32, #tpu.memory_space<vmem>>, vector<1x32xf32>
    %434 = vector.broadcast %433 : vector<1x32xf32> to vector<2x32xf32>
    %435 = arith.mulf %432, %434 : vector<2x32xf32>
    %cst_160 = arith.constant dense<0.000000e+00> : vector<2xf32>
    %436 = vector.multi_reduction <add>, %435, %cst_160 [1] : vector<2x32xf32> to vector<2xf32>
    %437 = vector.shape_cast %436 : vector<2xf32> to vector<2x1xf32>
    %c0_161 = arith.constant 0 : index
    %c0_162 = arith.constant 0 : index
    %438 = vector.load %arg16[%c0_161, %c0_162] : memref<1x1xf32, #tpu.memory_space<vmem>>, vector<1x1xf32>
    %439 = vector.broadcast %438 : vector<1x1xf32> to vector<2x1xf32>
    %440 = arith.addf %437, %439 : vector<2x1xf32>
    %441 = arith.negf %440 : vector<2x1xf32>
    %442 = math.exp %441 : vector<2x1xf32>
    %cst_163 = arith.constant 1.000000e+00 : f32
    %443 = vector.broadcast %cst_163 : f32 to vector<2x1xf32>
    %444 = arith.addf %443, %442 : vector<2x1xf32>
    %445 = arith.divf %443, %444 : vector<2x1xf32>
    %446 = vector.shape_cast %445 : vector<2x1xf32> to vector<2x1xf32>
    %447 = vector.broadcast %446 : vector<2x1xf32> to vector<2x128xf32>
    %c0_164 = arith.constant 0 : index
    %c0_165 = arith.constant 0 : index
    %448 = vector.load %arg17[%c0_164, %c0_165] : memref<2x128xf32, #tpu.memory_space<vmem>>, vector<2x128xf32>
    tpu.vector_store %arg17[%c0_164, %c0_165], %447 {strides = array<i32>} : memref<2x128xf32, #tpu.memory_space<vmem>>, vector<2x128xf32>,
    return
  }
}

</mosaic_0001>

<llo_original>
// kernel: plagiarism_detector_forward.1
$region0: #{plagiarism_detector_forward.1}
  #allocation0 [shape = 'u32[]', space=smem, size = 0x4, offset = 0x4, fixed_abs, tag = 'smem constant byte address 0x4 - core index']
  #allocation1 [shape = 'u32[72,128]{1,0:T(1,128)}', space=vmem, size = 0x9000, scoped, tag = 'internal scratch']
  #allocation2 [shape = 'f32[1,1]{1,0:T(1,128)S(1)}', space=vmem, size = 0x200, scoped, tag = 'scoped memory for plagiarism_detector_forward.1']
  %s0 = inlined_call_operand.vmem [shape: f32[2,8,32], index: 0, kind: input, shape index: {}]
  %s1 = inlined_call_operand.vmem [shape: f32[2,1,8], index: 1, kind: input, shape index: {}]
  %s2 = inlined_call_operand.vmem [shape: f32[4,1,32], index: 2, kind: input, shape index: {}]
  %s3 = inlined_call_operand.vmem [shape: f32[2,32,96], index: 3, kind: input, shape index: {}]
  %s4 = inlined_call_operand.vmem [shape: f32[2,1,96], index: 4, kind: input, shape index: {}]
  %s5 = inlined_call_operand.vmem [shape: f32[2,32,32], index: 5, kind: input, shape index: {}]
  %s6 = inlined_call_operand.vmem [shape: f32[2,1,32], index: 6, kind: input, shape index: {}]
  %s7 = inlined_call_operand.vmem [shape: f32[2,1,32], index: 7, kind: input, shape index: {}]
  %s8 = inlined_call_operand.vmem [shape: f32[2,1,32], index: 8, kind: input, shape index: {}]
  %s9 = inlined_call_operand.vmem [shape: f32[2,32,64], index: 9, kind: input, shape index: {}]
  %s10 = inlined_call_operand.vmem [shape: f32[2,1,64], index: 10, kind: input, shape index: {}]
  %s11 = inlined_call_operand.vmem [shape: f32[2,64,32], index: 11, kind: input, shape index: {}]
  %s12 = inlined_call_operand.vmem [shape: f32[2,1,32], index: 12, kind: input, shape index: {}]
  %s13 = inlined_call_operand.vmem [shape: f32[2,1,32], index: 13, kind: input, shape index: {}]
  %s14 = inlined_call_operand.vmem [shape: f32[2,1,32], index: 14, kind: input, shape index: {}]
  %s15 = inlined_call_operand.vmem [shape: f32[1,32], index: 15, kind: input, shape index: {}]
  %s16 = inlined_call_operand.<no memory space> [shape: f32[1,1], index: 16, kind: input, shape index: {}]
  %s17 = inlined_call_operand.vmem [shape: f32[2,128], index: 17, kind: output, shape index: {}]
  %s18 = sld [smem:[#allocation0]]
  $region78: #{plagiarism_detector_forward.1} parent=0
    _
  %s20 = ssub.s32 1, %s18
  %s21 = scalar_select 0, %s20, %s18
  %v22 = vstv %s16
  %23 = vst [vmem:[#allocation2] sm:$0x1] %v22
  // Predicated region
  $region2: #{plagiarism_detector_forward.1} parent=0 // pred_check
    _
  $region3: #{plagiarism_detector_forward.1} parent=0 // pred_check_branch
    %25 = sbr.rel (0) target = $region5
  $region4: #{plagiarism_detector_forward.1} parent=0 // pred_region
    _
  $region5: #{plagiarism_detector_forward.1} parent=0 // pred_fallthru
    _
  // Predicated region
  $region6: #{plagiarism_detector_forward.1} parent=0 // pred_check
    _
  $region7: #{plagiarism_detector_forward.1} parent=0 // pred_check_branch
    %27 = sbr.rel (0) target = $region9
  $region8: #{plagiarism_detector_forward.1} parent=0 // pred_region
    _
  $region9: #{plagiarism_detector_forward.1} parent=0 // pred_fallthru
    _
  // Predicated region
  $region10: #{plagiarism_detector_forward.1} parent=0 // pred_check
    _
  $region11: #{plagiarism_detector_forward.1} parent=0 // pred_check_branch
    %29 = sbr.rel (0) target = $region13
  $region12: #{plagiarism_detector_forward.1} parent=0 // pred_region
    _
  $region13: #{plagiarism_detector_forward.1} parent=0 // pred_fallthru
    _
  // Predicated region
  $region14: #{plagiarism_detector_forward.1} parent=0 // pred_check
    _
  $region15: #{plagiarism_detector_forward.1} parent=0 // pred_check_branch
    %31 = sbr.rel (0) target = $region17
  $region16: #{plagiarism_detector_forward.1} parent=0 // pred_region
    _
  $region17: #{plagiarism_detector_forward.1} parent=0 // pred_fallthru
    _
  // Predicated region
  $region18: #{plagiarism_detector_forward.1} parent=0 // pred_check
    _
  $region19: #{plagiarism_detector_forward.1} parent=0 // pred_check_branch
    %33 = sbr.rel (0) target = $region21
  $region20: #{plagiarism_detector_forward.1} parent=0 // pred_region
    _
  $region21: #{plagiarism_detector_forward.1} parent=0 // pred_fallthru
    _
  // Predicated region
  $region22: #{plagiarism_detector_forward.1} parent=0 // pred_check
    _
  $region23: #{plagiarism_detector_forward.1} parent=0 // pred_check_branch
    %35 = sbr.rel (0) target = $region25
  $region24: #{plagiarism_detector_forward.1} parent=0 // pred_region
    _
  $region25: #{plagiarism_detector_forward.1} parent=0 // pred_fallthru
    _
  // Predicated region
  $region26: #{plagiarism_detector_forward.1} parent=0 // pred_check
    _
  $region27: #{plagiarism_detector_forward.1} parent=0 // pred_check_branch
    %37 = sbr.rel (0) target = $region29
  $region28: #{plagiarism_detector_forward.1} parent=0 // pred_region
    _
  $region29: #{plagiarism_detector_forward.1} parent=0 // pred_fallthru
    _
  // Predicated region
  $region30: #{plagiarism_detector_forward.1} parent=0 // pred_check
    _
  $region31: #{plagiarism_detector_forward.1} parent=0 // pred_check_branch
    %39 = sbr.rel (0) target = $region33
  $region32: #{plagiarism_detector_forward.1} parent=0 // pred_region
    _
  $region33: #{plagiarism_detector_forward.1} parent=0 // pred_fallthru
    _
  // Predicated region
  $region34: #{plagiarism_detector_forward.1} parent=0 // pred_check
    _
  $region35: #{plagiarism_detector_forward.1} parent=0 // pred_check_branch
    %41 = sbr.rel (0) target = $region37
  $region36: #{plagiarism_detector_forward.1} parent=0 // pred_region
    _
  $region37: #{plagiarism_detector_forward.1} parent=0 // pred_fallthru
    _
  // Predicated region
  $region38: #{plagiarism_detector_forward.1} parent=0 // pred_check
    _
  $region39: #{plagiarism_detector_forward.1} parent=0 // pred_check_branch
    %43 = sbr.rel (0) target = $region41
  $region40: #{plagiarism_detector_forward.1} parent=0 // pred_region
    _
  $region41: #{plagiarism_detector_forward.1} parent=0 // pred_fallthru
    _
  // Predicated region
  $region42: #{plagiarism_detector_forward.1} parent=0 // pred_check
    _
  $region43: #{plagiarism_detector_forward.1} parent=0 // pred_check_branch
    %45 = sbr.rel (0) target = $region45
  $region44: #{plagiarism_detector_forward.1} parent=0 // pred_region
    _
  $region45: #{plagiarism_detector_forward.1} parent=0 // pred_fallthru
    _
  // Predicated region
  $region46: #{plagiarism_detector_forward.1} parent=0 // pred_check
    _
  $region47: #{plagiarism_detector_forward.1} parent=0 // pred_check_branch
    %47 = sbr.rel (0) target = $region49
  $region48: #{plagiarism_detector_forward.1} parent=0 // pred_region
    _
  $region49: #{plagiarism_detector_forward.1} parent=0 // pred_fallthru
    _
  // Predicated region
  $region50: #{plagiarism_detector_forward.1} parent=0 // pred_check
    _
  $region51: #{plagiarism_detector_forward.1} parent=0 // pred_check_branch
    %49 = sbr.rel (0) target = $region53
  $region52: #{plagiarism_detector_forward.1} parent=0 // pred_region
    _
  $region53: #{plagiarism_detector_forward.1} parent=0 // pred_fallthru
    _
  // Predicated region
  $region54: #{plagiarism_detector_forward.1} parent=0 // pred_check
    _
  $region55: #{plagiarism_detector_forward.1} parent=0 // pred_check_branch
    %51 = sbr.rel (0) target = $region57
  $region56: #{plagiarism_detector_forward.1} parent=0 // pred_region
    _
  $region57: #{plagiarism_detector_forward.1} parent=0 // pred_fallthru
    _
  // Predicated region
  $region58: #{plagiarism_detector_forward.1} parent=0 // pred_check
    _
  $region59: #{plagiarism_detector_forward.1} parent=0 // pred_check_branch
    %53 = sbr.rel (0) target = $region61
  $region60: #{plagiarism_detector_forward.1} parent=0 // pred_region
    _
  $region61: #{plagiarism_detector_forward.1} parent=0 // pred_fallthru
    _
  // Predicated region
  $region62: #{plagiarism_detector_forward.1} parent=0 // pred_check
    _
  $region63: #{plagiarism_detector_forward.1} parent=0 // pred_check_branch
    %55 = sbr.rel (0) target = $region65
  $region64: #{plagiarism_detector_forward.1} parent=0 // pred_region
    _
  $region65: #{plagiarism_detector_forward.1} parent=0 // pred_fallthru
    _
  // Predicated region
  $region66: #{plagiarism_detector_forward.1} parent=0 // pred_check
    _
  $region67: #{plagiarism_detector_forward.1} parent=0 // pred_check_branch
    %57 = sbr.rel (0) target = $region69
  $region68: #{plagiarism_detector_forward.1} parent=0 // pred_region
    _
  $region69: #{plagiarism_detector_forward.1} parent=0 // pred_fallthru
    _
  %v58 = vld [vmem:[%s0] sm:$0xff]
  %v59 = vld [vmem:[%s0 + $0x8] sm:$0xff]
  %v60 = vld [vmem:[%s1] sm:$0x1]
  %v61 = vld [vmem:[%s1 + $0x1] sm:$0x1]
  %v62 = vsub.f32 %v60, 1.0
  %v63 = vsub.f32 %v61, 1.0
  %v64 = vmul.f32 %v62, 1e+09
  %v65 = vmul.f32 %v63, 1e+09
  %v66 = vld [vmem:[%s2] sm:$0x1]
  %v67 = vld [vmem:[%s2 + $0x1] sm:$0x1]
  %v68 = vld [vmem:[%s2 + $0x2] sm:$0x1]
  %v69 = vld [vmem:[%s2 + $0x3] sm:$0x1]
  %v70 = vld [vmem:[%s3] sm:$0xff]
  %v71 = vld [vmem:[%s3 + $0x8] sm:$0xff]
  %v72 = vld [vmem:[%s3 + $0x10] sm:$0xff]
  %v73 = vld [vmem:[%s3 + $0x18] sm:$0xff]
  %v74 = vld [vmem:[%s4] sm:$0x1]
  %v76 = vperm.slane %v74, 0
  %vm78 = vcmask 261120
  %v80 = vsel %vm78, %v58, 0
  %v83 = vsel %vm78, %v59, 0
  %85 = vmatpush.msra.mxu0 0.0
  %86 = vmatpush.msra.mxu0 0.0
  %87 = vmatpush.msra.mxu0 0.0
  %88 = vmatpush.msra.mxu0 0.0
  %89 = vmatpush.msra.mxu0 0.0
  %90 = vmatpush.msra.mxu0 0.0
  %91 = vmatpush.msra.mxu0 0.0
  %92 = vmatpush.msra.mxu0 0.0
  %93 = vmatpush.msra.mxu0 0.0
  %94 = vmatpush.msra.mxu0 0.0
  %95 = vmatpush.msra.mxu0 0.0
  %96 = vmatpush.msra.mxu0 0.0
  %97 = vmatpush.msra.mxu0 %v73
  %98 = vmatpush.msra.mxu0 %v72
  %99 = vmatpush.msra.mxu0 %v71
  %100 = vmatpush.msra.mxu0 %v70
  %101 = vmatmul.f32.gmra.mxu0 %v80
  %v102 = vpop.f32.mrf.mxu0
  %v103 = vadd.f32 %v76, %v102
  %104 = vmatmul.f32.gmra.mxu0 %v83
  %v105 = vpop.f32.mrf.mxu0
  %v106 = vadd.f32 %v76, %v105
  %107 = vdwg.mxu0
  %v109 = vperm.slane %v66, 0
  %v111 = vmul.f32 %v103, %v109
  %v112 = vmul.f32 %v106, %v109
  %114 = vrot.lane.b32.xlu0 %v103, 96
  %v115 = vpop.permute.xlu0 %114
  %v117 = vsel %vm78, %v111, 0
  %v119 = vsel %vm78, %v115, 0
  %121 = vmatpush.xpose.msra.mxu0 0.0
  %122 = vmatpush.xpose.msra.mxu0 0.0
  %123 = vmatpush.xpose.msra.mxu0 0.0
  %124 = vmatpush.xpose.msra.mxu0 0.0
  %125 = vmatpush.xpose.msra.mxu0 0.0
  %126 = vmatpush.xpose.msra.mxu0 0.0
  %127 = vmatpush.xpose.msra.mxu0 0.0
  %128 = vmatpush.xpose.msra.mxu0 0.0
  %129 = vmatpush.xpose.msra.mxu0 0.0
  %130 = vmatpush.xpose.msra.mxu0 0.0
  %131 = vmatpush.xpose.msra.mxu0 0.0
  %132 = vmatpush.xpose.msra.mxu0 0.0
  %133 = vmatpush.xpose.msra.mxu0 0.0
  %134 = vmatpush.xpose.msra.mxu0 0.0
  %135 = vmatpush.xpose.msra.mxu0 0.0
  %136 = vmatpush.xpose.msra.mxu0 %v119
  %137 = vmatmul.f32.gmra.mxu0 %v117
  %v138 = vpop.f32.mrf.mxu0
  %v139 = vadd.f32 0.0, %v138
  %140 = vdwg.mxu0
  %142 = vrot.lane.b32.xlu0 %v106, 96
  %v143 = vpop.permute.xlu0 %142
  %v145 = vsel %vm78, %v112, 0
  %v147 = vsel %vm78, %v143, 0
  %149 = vmatpush.xpose.msra.mxu0 0.0
  %150 = vmatpush.xpose.msra.mxu0 0.0
  %151 = vmatpush.xpose.msra.mxu0 0.0
  %152 = vmatpush.xpose.msra.mxu0 0.0
  %153 = vmatpush.xpose.msra.mxu0 0.0
  %154 = vmatpush.xpose.msra.mxu0 0.0
  %155 = vmatpush.xpose.msra.mxu0 0.0
  %156 = vmatpush.xpose.msra.mxu0 0.0
  %157 = vmatpush.xpose.msra.mxu0 0.0
  %158 = vmatpush.xpose.msra.mxu0 0.0
  %159 = vmatpush.xpose.msra.mxu0 0.0
  %160 = vmatpush.xpose.msra.mxu0 0.0
  %161 = vmatpush.xpose.msra.mxu0 0.0
  %162 = vmatpush.xpose.msra.mxu0 0.0
  %163 = vmatpush.xpose.msra.mxu0 0.0
  %164 = vmatpush.xpose.msra.mxu0 %v147
  %165 = vmatmul.f32.gmra.mxu0 %v145
  %v166 = vpop.f32.mrf.mxu0
  %v167 = vadd.f32 0.0, %v166
  %168 = vdwg.mxu0
  %v169 = vmul.f32 %v139, 0.35355338
  %v170 = vmul.f32 %v167, 0.35355338
  %v173 = vperm.slane %v64, 0
  %v174 = vperm.slane %v65, 0
  %v177 = vadd.f32 %v169, %v173
  %v178 = vadd.f32 %v170, %v174
  %vm179 = vcmask 64512
  %v180 = vsel %vm179, %v177, -inf
  %181 = vmax.xlane.f32.xlu0 %v180
  %v182 = vpop.xlane.xlu0 %181
  %v183 = vsel %vm179, %v178, -inf
  %184 = vmax.xlane.f32.xlu0 %v183
  %v185 = vpop.xlane.xlu0 %184
  %v186 = vsub.f32 %v177, %v182
  %v187 = vsub.f32 %v178, %v185
  %v188 = vmul.f32 %v186, 1.442695
  %v189 = vpow.pop %v188
  %v190 = vmul.f32 %v187, 1.442695
  %v191 = vpow.pop %v190
  %v192 = vsel %vm179, %v189, 0.0
  %193 = vadd.xlane.f32.xlu0 %v192
  %v194 = vpop.xlane.xlu0 %193
  %v195 = vsel %vm179, %v191, 0.0
  %196 = vadd.xlane.f32.xlu0 %v195
  %v197 = vpop.xlane.xlu0 %196
  %v198 = vrcp.pop %v194
  %v199 = vrcp.pop %v197
  %v200 = vmul.f32 %v189, %v198
  %v201 = vmul.f32 %v191, %v199
  %202 = vrot.lane.b32.xlu0 %v109, 64
  %v203 = vpop.permute.xlu0 %202
  %v205 = vmul.f32 %v103, %v203
  %v206 = vmul.f32 %v106, %v203
  %v208 = vperm.slane %v67, 0
  %v210 = vmul.f32 %v103, %v208
  %v211 = vmul.f32 %v106, %v208
  %v213 = vsel %vm78, %v210, 0
  %215 = vmatpush.xpose.msra.mxu0 0.0
  %216 = vmatpush.xpose.msra.mxu0 0.0
  %217 = vmatpush.xpose.msra.mxu0 0.0
  %218 = vmatpush.xpose.msra.mxu0 0.0
  %219 = vmatpush.xpose.msra.mxu0 0.0
  %220 = vmatpush.xpose.msra.mxu0 0.0
  %221 = vmatpush.xpose.msra.mxu0 0.0
  %222 = vmatpush.xpose.msra.mxu0 0.0
  %223 = vmatpush.xpose.msra.mxu0 0.0
  %224 = vmatpush.xpose.msra.mxu0 0.0
  %225 = vmatpush.xpose.msra.mxu0 0.0
  %226 = vmatpush.xpose.msra.mxu0 0.0
  %227 = vmatpush.xpose.msra.mxu0 0.0
  %228 = vmatpush.xpose.msra.mxu0 0.0
  %229 = vmatpush.xpose.msra.mxu0 0.0
  %230 = vmatpush.xpose.msra.mxu0 %v119
  %231 = vmatmul.f32.gmra.mxu0 %v213
  %v232 = vpop.f32.mrf.mxu0
  %v233 = vadd.f32 0.0, %v232
  %234 = vdwg.mxu0
  %v236 = vsel %vm78, %v211, 0
  %238 = vmatpush.xpose.msra.mxu0 0.0
  %239 = vmatpush.xpose.msra.mxu0 0.0
  %240 = vmatpush.xpose.msra.mxu0 0.0
  %241 = vmatpush.xpose.msra.mxu0 0.0
  %242 = vmatpush.xpose.msra.mxu0 0.0
  %243 = vmatpush.xpose.msra.mxu0 0.0
  %244 = vmatpush.xpose.msra.mxu0 0.0
  %245 = vmatpush.xpose.msra.mxu0 0.0
  %246 = vmatpush.xpose.msra.mxu0 0.0
  %247 = vmatpush.xpose.msra.mxu0 0.0
  %248 = vmatpush.xpose.msra.mxu0 0.0
  %249 = vmatpush.xpose.msra.mxu0 0.0
  %250 = vmatpush.xpose.msra.mxu0 0.0
  %251 = vmatpush.xpose.msra.mxu0 0.0
  %252 = vmatpush.xpose.msra.mxu0 0.0
  %253 = vmatpush.xpose.msra.mxu0 %v147
  %254 = vmatmul.f32.gmra.mxu0 %v236
  %v255 = vpop.f32.mrf.mxu0
  %v256 = vadd.f32 0.0, %v255
  %257 = vdwg.mxu0
  %v258 = vmul.f32 %v233, 0.35355338
  %v259 = vmul.f32 %v256, 0.35355338
  %v260 = vadd.f32 %v258, %v173
  %v261 = vadd.f32 %v259, %v174
  %v262 = vsel %vm179, %v260, -inf
  %263 = vmax.xlane.f32.xlu0 %v262
  %v264 = vpop.xlane.xlu0 %263
  %v265 = vsel %vm179, %v261, -inf
  %266 = vmax.xlane.f32.xlu0 %v265
  %v267 = vpop.xlane.xlu0 %266
  %v268 = vsub.f32 %v260, %v264
  %v269 = vsub.f32 %v261, %v267
  %v270 = vmul.f32 %v268, 1.442695
  %v271 = vpow.pop %v270
  %v272 = vmul.f32 %v269, 1.442695
  %v273 = vpow.pop %v272
  %v274 = vsel %vm179, %v271, 0.0
  %275 = vadd.xlane.f32.xlu0 %v274
  %v276 = vpop.xlane.xlu0 %275
  %v277 = vsel %vm179, %v273, 0.0
  %278 = vadd.xlane.f32.xlu0 %v277
  %v279 = vpop.xlane.xlu0 %278
  %v280 = vrcp.pop %v276
  %v281 = vrcp.pop %v279
  %v282 = vmul.f32 %v271, %v280
  %v283 = vmul.f32 %v273, %v281
  %284 = vrot.lane.b32.xlu0 %v208, 64
  %v285 = vpop.permute.xlu0 %284
  %v287 = vmul.f32 %v103, %v285
  %v288 = vmul.f32 %v106, %v285
  %290 = vrot.lane.b32.xlu0 %v287, 64
  %v291 = vpop.permute.xlu0 %290
  %v294 = vsel %vm179, %v282, 0
  %296 = vmatpush.msra.mxu0 0.0
  %297 = vmatpush.msra.mxu0 0.0
  %298 = vmatpush.msra.mxu0 0.0
  %299 = vmatpush.msra.mxu0 0.0
  %300 = vmatpush.msra.mxu0 0.0
  %301 = vmatpush.msra.mxu0 0.0
  %302 = vmatpush.msra.mxu0 0.0
  %303 = vmatpush.msra.mxu0 0.0
  %304 = vmatpush.msra.mxu0 0.0
  %305 = vmatpush.msra.mxu0 0.0
  %306 = vmatpush.msra.mxu0 0.0
  %307 = vmatpush.msra.mxu0 0.0
  %308 = vmatpush.msra.mxu0 0.0
  %309 = vmatpush.msra.mxu0 0.0
  %310 = vmatpush.msra.mxu0 0.0
  %311 = vmatpush.msra.mxu0 %v291
  %312 = vmatmul.f32.gmra.mxu0 %v294
  %v313 = vpop.f32.mrf.mxu0
  %v314 = vadd.f32 0.0, %v313
  %315 = vdwg.mxu0
  %317 = vrot.lane.b32.xlu0 %v288, 64
  %v318 = vpop.permute.xlu0 %317
  %v321 = vsel %vm179, %v283, 0
  %323 = vmatpush.msra.mxu0 0.0
  %324 = vmatpush.msra.mxu0 0.0
  %325 = vmatpush.msra.mxu0 0.0
  %326 = vmatpush.msra.mxu0 0.0
  %327 = vmatpush.msra.mxu0 0.0
  %328 = vmatpush.msra.mxu0 0.0
  %329 = vmatpush.msra.mxu0 0.0
  %330 = vmatpush.msra.mxu0 0.0
  %331 = vmatpush.msra.mxu0 0.0
  %332 = vmatpush.msra.mxu0 0.0
  %333 = vmatpush.msra.mxu0 0.0
  %334 = vmatpush.msra.mxu0 0.0
  %335 = vmatpush.msra.mxu0 0.0
  %336 = vmatpush.msra.mxu0 0.0
  %337 = vmatpush.msra.mxu0 0.0
  %338 = vmatpush.msra.mxu0 %v318
  %339 = vmatmul.f32.gmra.mxu0 %v321
  %v340 = vpop.f32.mrf.mxu0
  %v341 = vadd.f32 0.0, %v340
  %342 = vdwg.mxu0
  %344 = vrot.lane.b32.xlu0 %v205, 64
  %v345 = vpop.permute.xlu0 %344
  %v348 = vsel %vm179, %v200, 0
  %350 = vmatpush.msra.mxu0 0.0
  %351 = vmatpush.msra.mxu0 0.0
  %352 = vmatpush.msra.mxu0 0.0
  %353 = vmatpush.msra.mxu0 0.0
  %354 = vmatpush.msra.mxu0 0.0
  %355 = vmatpush.msra.mxu0 0.0
  %356 = vmatpush.msra.mxu0 0.0
  %357 = vmatpush.msra.mxu0 0.0
  %358 = vmatpush.msra.mxu0 0.0
  %359 = vmatpush.msra.mxu0 0.0
  %360 = vmatpush.msra.mxu0 0.0
  %361 = vmatpush.msra.mxu0 0.0
  %362 = vmatpush.msra.mxu0 0.0
  %363 = vmatpush.msra.mxu0 0.0
  %364 = vmatpush.msra.mxu0 0.0
  %365 = vmatpush.msra.mxu0 %v345
  %366 = vmatmul.f32.gmra.mxu0 %v348
  %v367 = vpop.f32.mrf.mxu0
  %v368 = vadd.f32 %v314, %v367
  %369 = vdwg.mxu0
  %371 = vrot.lane.b32.xlu0 %v206, 64
  %v372 = vpop.permute.xlu0 %371
  %v375 = vsel %vm179, %v201, 0
  %377 = vmatpush.msra.mxu0 0.0
  %378 = vmatpush.msra.mxu0 0.0
  %379 = vmatpush.msra.mxu0 0.0
  %380 = vmatpush.msra.mxu0 0.0
  %381 = vmatpush.msra.mxu0 0.0
  %382 = vmatpush.msra.mxu0 0.0
  %383 = vmatpush.msra.mxu0 0.0
  %384 = vmatpush.msra.mxu0 0.0
  %385 = vmatpush.msra.mxu0 0.0
  %386 = vmatpush.msra.mxu0 0.0
  %387 = vmatpush.msra.mxu0 0.0
  %388 = vmatpush.msra.mxu0 0.0
  %389 = vmatpush.msra.mxu0 0.0
  %390 = vmatpush.msra.mxu0 0.0
  %391 = vmatpush.msra.mxu0 0.0
  %392 = vmatpush.msra.mxu0 %v372
  %393 = vmatmul.f32.gmra.mxu0 %v375
  %v394 = vpop.f32.mrf.mxu0
  %v395 = vadd.f32 %v341, %v394
  %396 = vdwg.mxu0
  %v398 = vperm.slane %v68, 0
  %v400 = vmul.f32 %v103, %v398
  %v401 = vmul.f32 %v106, %v398
  %v403 = vsel %vm78, %v400, 0
  %405 = vmatpush.xpose.msra.mxu0 0.0
  %406 = vmatpush.xpose.msra.mxu0 0.0
  %407 = vmatpush.xpose.msra.mxu0 0.0
  %408 = vmatpush.xpose.msra.mxu0 0.0
  %409 = vmatpush.xpose.msra.mxu0 0.0
  %410 = vmatpush.xpose.msra.mxu0 0.0
  %411 = vmatpush.xpose.msra.mxu0 0.0
  %412 = vmatpush.xpose.msra.mxu0 0.0
  %413 = vmatpush.xpose.msra.mxu0 0.0
  %414 = vmatpush.xpose.msra.mxu0 0.0
  %415 = vmatpush.xpose.msra.mxu0 0.0
  %416 = vmatpush.xpose.msra.mxu0 0.0
  %417 = vmatpush.xpose.msra.mxu0 0.0
  %418 = vmatpush.xpose.msra.mxu0 0.0
  %419 = vmatpush.xpose.msra.mxu0 0.0
  %420 = vmatpush.xpose.msra.mxu0 %v119
  %421 = vmatmul.f32.gmra.mxu0 %v403
  %v422 = vpop.f32.mrf.mxu0
  %v423 = vadd.f32 0.0, %v422
  %424 = vdwg.mxu0
  %v426 = vsel %vm78, %v401, 0
  %428 = vmatpush.xpose.msra.mxu0 0.0
  %429 = vmatpush.xpose.msra.mxu0 0.0
  %430 = vmatpush.xpose.msra.mxu0 0.0
  %431 = vmatpush.xpose.msra.mxu0 0.0
  %432 = vmatpush.xpose.msra.mxu0 0.0
  %433 = vmatpush.xpose.msra.mxu0 0.0
  %434 = vmatpush.xpose.msra.mxu0 0.0
  %435 = vmatpush.xpose.msra.mxu0 0.0
  %436 = vmatpush.xpose.msra.mxu0 0.0
  %437 = vmatpush.xpose.msra.mxu0 0.0
  %438 = vmatpush.xpose.msra.mxu0 0.0
  %439 = vmatpush.xpose.msra.mxu0 0.0
  %440 = vmatpush.xpose.msra.mxu0 0.0
  %441 = vmatpush.xpose.msra.mxu0 0.0
  %442 = vmatpush.xpose.msra.mxu0 0.0
  %443 = vmatpush.xpose.msra.mxu0 %v147
  %444 = vmatmul.f32.gmra.mxu0 %v426
  %v445 = vpop.f32.mrf.mxu0
  %v446 = vadd.f32 0.0, %v445
  %447 = vdwg.mxu0
  %v448 = vmul.f32 %v423, 0.35355338
  %v449 = vmul.f32 %v446, 0.35355338
  %v450 = vadd.f32 %v448, %v173
  %v451 = vadd.f32 %v449, %v174
  %v452 = vsel %vm179, %v450, -inf
  %453 = vmax.xlane.f32.xlu0 %v452
  %v454 = vpop.xlane.xlu0 %453
  %v455 = vsel %vm179, %v451, -inf
  %456 = vmax.xlane.f32.xlu0 %v455
  %v457 = vpop.xlane.xlu0 %456
  %v458 = vsub.f32 %v450, %v454
  %v459 = vsub.f32 %v451, %v457
  %v460 = vmul.f32 %v458, 1.442695
  %v461 = vpow.pop %v460
  %v462 = vmul.f32 %v459, 1.442695
  %v463 = vpow.pop %v462
  %v464 = vsel %vm179, %v461, 0.0
  %465 = vadd.xlane.f32.xlu0 %v464
  %v466 = vpop.xlane.xlu0 %465
  %v467 = vsel %vm179, %v463, 0.0
  %468 = vadd.xlane.f32.xlu0 %v467
  %v469 = vpop.xlane.xlu0 %468
  %v470 = vrcp.pop %v466
  %v471 = vrcp.pop %v469
  %v472 = vmul.f32 %v461, %v470
  %v473 = vmul.f32 %v463, %v471
  %474 = vrot.lane.b32.xlu0 %v398, 64
  %v475 = vpop.permute.xlu0 %474
  %v477 = vmul.f32 %v103, %v475
  %v478 = vmul.f32 %v106, %v475
  %480 = vrot.lane.b32.xlu0 %v477, 64
  %v481 = vpop.permute.xlu0 %480
  %v484 = vsel %vm179, %v472, 0
  %486 = vmatpush.msra.mxu0 0.0
  %487 = vmatpush.msra.mxu0 0.0
  %488 = vmatpush.msra.mxu0 0.0
  %489 = vmatpush.msra.mxu0 0.0
  %490 = vmatpush.msra.mxu0 0.0
  %491 = vmatpush.msra.mxu0 0.0
  %492 = vmatpush.msra.mxu0 0.0
  %493 = vmatpush.msra.mxu0 0.0
  %494 = vmatpush.msra.mxu0 0.0
  %495 = vmatpush.msra.mxu0 0.0
  %496 = vmatpush.msra.mxu0 0.0
  %497 = vmatpush.msra.mxu0 0.0
  %498 = vmatpush.msra.mxu0 0.0
  %499 = vmatpush.msra.mxu0 0.0
  %500 = vmatpush.msra.mxu0 0.0
  %501 = vmatpush.msra.mxu0 %v481
  %502 = vmatmul.f32.gmra.mxu0 %v484
  %v503 = vpop.f32.mrf.mxu0
  %v504 = vadd.f32 0.0, %v503
  %505 = vdwg.mxu0
  %507 = vrot.lane.b32.xlu0 %v478, 64
  %v508 = vpop.permute.xlu0 %507
  %v511 = vsel %vm179, %v473, 0
  %513 = vmatpush.msra.mxu0 0.0
  %514 = vmatpush.msra.mxu0 0.0
  %515 = vmatpush.msra.mxu0 0.0
  %516 = vmatpush.msra.mxu0 0.0
  %517 = vmatpush.msra.mxu0 0.0
  %518 = vmatpush.msra.mxu0 0.0
  %519 = vmatpush.msra.mxu0 0.0
  %520 = vmatpush.msra.mxu0 0.0
  %521 = vmatpush.msra.mxu0 0.0
  %522 = vmatpush.msra.mxu0 0.0
  %523 = vmatpush.msra.mxu0 0.0
  %524 = vmatpush.msra.mxu0 0.0
  %525 = vmatpush.msra.mxu0 0.0
  %526 = vmatpush.msra.mxu0 0.0
  %527 = vmatpush.msra.mxu0 0.0
  %528 = vmatpush.msra.mxu0 %v508
  %529 = vmatmul.f32.gmra.mxu0 %v511
  %v530 = vpop.f32.mrf.mxu0
  %v531 = vadd.f32 0.0, %v530
  %532 = vdwg.mxu0
  %v533 = vadd.f32 %v368, %v504
  %v534 = vadd.f32 %v395, %v531
  %v536 = vperm.slane %v69, 0
  %v538 = vmul.f32 %v103, %v536
  %v539 = vmul.f32 %v106, %v536
  %v541 = vsel %vm78, %v538, 0
  %543 = vmatpush.xpose.msra.mxu0 0.0
  %544 = vmatpush.xpose.msra.mxu0 0.0
  %545 = vmatpush.xpose.msra.mxu0 0.0
  %546 = vmatpush.xpose.msra.mxu0 0.0
  %547 = vmatpush.xpose.msra.mxu0 0.0
  %548 = vmatpush.xpose.msra.mxu0 0.0
  %549 = vmatpush.xpose.msra.mxu0 0.0
  %550 = vmatpush.xpose.msra.mxu0 0.0
  %551 = vmatpush.xpose.msra.mxu0 0.0
  %552 = vmatpush.xpose.msra.mxu0 0.0
  %553 = vmatpush.xpose.msra.mxu0 0.0
  %554 = vmatpush.xpose.msra.mxu0 0.0
  %555 = vmatpush.xpose.msra.mxu0 0.0
  %556 = vmatpush.xpose.msra.mxu0 0.0
  %557 = vmatpush.xpose.msra.mxu0 0.0
  %558 = vmatpush.xpose.msra.mxu0 %v119
  %559 = vmatmul.f32.gmra.mxu0 %v541
  %v560 = vpop.f32.mrf.mxu0
  %v561 = vadd.f32 0.0, %v560
  %562 = vdwg.mxu0
  %v564 = vsel %vm78, %v539, 0
  %566 = vmatpush.xpose.msra.mxu0 0.0
  %567 = vmatpush.xpose.msra.mxu0 0.0
  %568 = vmatpush.xpose.msra.mxu0 0.0
  %569 = vmatpush.xpose.msra.mxu0 0.0
  %570 = vmatpush.xpose.msra.mxu0 0.0
  %571 = vmatpush.xpose.msra.mxu0 0.0
  %572 = vmatpush.xpose.msra.mxu0 0.0
  %573 = vmatpush.xpose.msra.mxu0 0.0
  %574 = vmatpush.xpose.msra.mxu0 0.0
  %575 = vmatpush.xpose.msra.mxu0 0.0
  %576 = vmatpush.xpose.msra.mxu0 0.0
  %577 = vmatpush.xpose.msra.mxu0 0.0
  %578 = vmatpush.xpose.msra.mxu0 0.0
  %579 = vmatpush.xpose.msra.mxu0 0.0
  %580 = vmatpush.xpose.msra.mxu0 0.0
  %581 = vmatpush.xpose.msra.mxu0 %v147
  %582 = vmatmul.f32.gmra.mxu0 %v564
  %v583 = vpop.f32.mrf.mxu0
  %v584 = vadd.f32 0.0, %v583
  %585 = vdwg.mxu0
  %v586 = vmul.f32 %v561, 0.35355338
  %v587 = vmul.f32 %v584, 0.35355338
  %v588 = vadd.f32 %v586, %v173
  %v589 = vadd.f32 %v587, %v174
  %v590 = vsel %vm179, %v588, -inf
  %591 = vmax.xlane.f32.xlu0 %v590
  %v592 = vpop.xlane.xlu0 %591
  %v593 = vsel %vm179, %v589, -inf
  %594 = vmax.xlane.f32.xlu0 %v593
  %v595 = vpop.xlane.xlu0 %594
  %v596 = vsub.f32 %v588, %v592
  %v597 = vsub.f32 %v589, %v595
  %v598 = vmul.f32 %v596, 1.442695
  %v599 = vpow.pop %v598
  %v600 = vmul.f32 %v597, 1.442695
  %v601 = vpow.pop %v600
  %v602 = vsel %vm179, %v599, 0.0
  %603 = vadd.xlane.f32.xlu0 %v602
  %v604 = vpop.xlane.xlu0 %603
  %v605 = vsel %vm179, %v601, 0.0
  %606 = vadd.xlane.f32.xlu0 %v605
  %v607 = vpop.xlane.xlu0 %606
  %v608 = vrcp.pop %v604
  %v609 = vrcp.pop %v607
  %v610 = vmul.f32 %v599, %v608
  %v611 = vmul.f32 %v601, %v609
  %612 = vrot.lane.b32.xlu0 %v536, 64
  %v613 = vpop.permute.xlu0 %612
  %v615 = vmul.f32 %v103, %v613
  %v616 = vmul.f32 %v106, %v613
  %618 = vrot.lane.b32.xlu0 %v615, 64
  %v619 = vpop.permute.xlu0 %618
  %v622 = vsel %vm179, %v610, 0
  %624 = vmatpush.msra.mxu0 0.0
  %625 = vmatpush.msra.mxu0 0.0
  %626 = vmatpush.msra.mxu0 0.0
  %627 = vmatpush.msra.mxu0 0.0
  %628 = vmatpush.msra.mxu0 0.0
  %629 = vmatpush.msra.mxu0 0.0
  %630 = vmatpush.msra.mxu0 0.0
  %631 = vmatpush.msra.mxu0 0.0
  %632 = vmatpush.msra.mxu0 0.0
  %633 = vmatpush.msra.mxu0 0.0
  %634 = vmatpush.msra.mxu0 0.0
  %635 = vmatpush.msra.mxu0 0.0
  %636 = vmatpush.msra.mxu0 0.0
  %637 = vmatpush.msra.mxu0 0.0
  %638 = vmatpush.msra.mxu0 0.0
  %639 = vmatpush.msra.mxu0 %v619
  %640 = vmatmul.f32.gmra.mxu0 %v622
  %v641 = vpop.f32.mrf.mxu0
  %v642 = vadd.f32 0.0, %v641
  %643 = vdwg.mxu0
  %645 = vrot.lane.b32.xlu0 %v616, 64
  %v646 = vpop.permute.xlu0 %645
  %v649 = vsel %vm179, %v611, 0
  %651 = vmatpush.msra.mxu0 0.0
  %652 = vmatpush.msra.mxu0 0.0
  %653 = vmatpush.msra.mxu0 0.0
  %654 = vmatpush.msra.mxu0 0.0
  %655 = vmatpush.msra.mxu0 0.0
  %656 = vmatpush.msra.mxu0 0.0
  %657 = vmatpush.msra.mxu0 0.0
  %658 = vmatpush.msra.mxu0 0.0
  %659 = vmatpush.msra.mxu0 0.0
  %660 = vmatpush.msra.mxu0 0.0
  %661 = vmatpush.msra.mxu0 0.0
  %662 = vmatpush.msra.mxu0 0.0
  %663 = vmatpush.msra.mxu0 0.0
  %664 = vmatpush.msra.mxu0 0.0
  %665 = vmatpush.msra.mxu0 0.0
  %666 = vmatpush.msra.mxu0 %v646
  %667 = vmatmul.f32.gmra.mxu0 %v649
  %v668 = vpop.f32.mrf.mxu0
  %v669 = vadd.f32 0.0, %v668
  %670 = vdwg.mxu0
  %v671 = vadd.f32 %v533, %v642
  %v672 = vadd.f32 %v534, %v669
  %v673 = vld [vmem:[%s5] sm:$0xff]
  %v674 = vld [vmem:[%s5 + $0x8] sm:$0xff]
  %v675 = vld [vmem:[%s5 + $0x10] sm:$0xff]
  %v676 = vld [vmem:[%s5 + $0x18] sm:$0xff]
  %v677 = vld [vmem:[%s6] sm:$0x1]
  %v679 = vperm.slane %v677, 0
  %v682 = vsel %vm78, %v671, 0
  %v685 = vsel %vm78, %v672, 0
  %687 = vmatpush.msra.mxu0 0.0
  %688 = vmatpush.msra.mxu0 0.0
  %689 = vmatpush.msra.mxu0 0.0
  %690 = vmatpush.msra.mxu0 0.0
  %691 = vmatpush.msra.mxu0 0.0
  %692 = vmatpush.msra.mxu0 0.0
  %693 = vmatpush.msra.mxu0 0.0
  %694 = vmatpush.msra.mxu0 0.0
  %695 = vmatpush.msra.mxu0 0.0
  %696 = vmatpush.msra.mxu0 0.0
  %697 = vmatpush.msra.mxu0 0.0
  %698 = vmatpush.msra.mxu0 0.0
  %699 = vmatpush.msra.mxu0 %v676
  %700 = vmatpush.msra.mxu0 %v675
  %701 = vmatpush.msra.mxu0 %v674
  %702 = vmatpush.msra.mxu0 %v673
  %703 = vmatmul.f32.gmra.mxu0 %v682
  %v704 = vpop.f32.mrf.mxu0
  %v705 = vadd.f32 %v679, %v704
  %706 = vmatmul.f32.gmra.mxu0 %v685
  %v707 = vpop.f32.mrf.mxu0
  %v708 = vadd.f32 %v679, %v707
  %709 = vdwg.mxu0
  %v710 = vadd.f32 %v58, %v705
  %v711 = vadd.f32 %v59, %v708
  %v712 = vsel %vm78, %v710, 0.0
  %713 = vadd.xlane.f32.xlu0 %v712
  %v714 = vpop.xlane.xlu0 %713
  %v715 = vsel %vm78, %v711, 0.0
  %716 = vadd.xlane.f32.xlu0 %v715
  %v717 = vpop.xlane.xlu0 %716
  %v718 = vrcp.pop 32.0
  %v719 = vmul.f32 32.0, %v718
  %v720 = vsub.f32 1.0, %v719
  %v721 = vmul.f32 %v718, %v720
  %v722 = vadd.f32 %v718, %v721
  %vm723 = vweird.f32 %v718
  %v724 = vsel %vm723, %v718, %v722
  %v725 = vmul.f32 %v714, %v724
  %v726 = vmul.f32 %v717, %v724
  %v727 = vsub.f32 %v710, %v725
  %v728 = vsub.f32 %v711, %v726
  %v729 = vmul.f32 %v727, %v727
  %v730 = vmul.f32 %v728, %v728
  %v731 = vsel %vm78, %v729, 0.0
  %732 = vadd.xlane.f32.xlu0 %v731
  %v733 = vpop.xlane.xlu0 %732
  %v734 = vsel %vm78, %v730, 0.0
  %735 = vadd.xlane.f32.xlu0 %v734
  %v736 = vpop.xlane.xlu0 %735
  %v737 = vmul.f32 %v733, %v724
  %v738 = vmul.f32 %v736, %v724
  %v739 = vadd.f32 %v737, 1e-07
  %v740 = vadd.f32 %v738, 1e-07
  %v741 = vrsqrt.pop %v739
  %v742 = vmul.f32 %v741, %v739
  %v743 = vmul.f32 %v742, %v741
  %v744 = vmul.f32 0.5, %v743
  %v745 = vsub.f32 1.5, %v744
  %v746 = vmul.f32 %v741, %v745
  %vm747 = vweird.f32 %v739
  %vm748 = vweird.f32 %v741
  %vm749 = vmor %vm747, %vm748
  %v750 = vsel %vm749, %v741, %v746
  %v751 = vrsqrt.pop %v740
  %v752 = vmul.f32 %v751, %v740
  %v753 = vmul.f32 %v752, %v751
  %v754 = vmul.f32 0.5, %v753
  %v755 = vsub.f32 1.5, %v754
  %v756 = vmul.f32 %v751, %v755
  %vm757 = vweird.f32 %v740
  %vm758 = vweird.f32 %v751
  %vm759 = vmor %vm757, %vm758
  %v760 = vsel %vm759, %v751, %v756
  %v761 = vmul.f32 %v727, %v750
  %v762 = vmul.f32 %v728, %v760
  %v763 = vld [vmem:[%s7] sm:$0x1]
  %v765 = vperm.slane %v763, 0
  %v767 = vmul.f32 %v761, %v765
  %v768 = vmul.f32 %v762, %v765
  %v769 = vld [vmem:[%s8] sm:$0x1]
  %v771 = vperm.slane %v769, 0
  %v773 = vadd.f32 %v767, %v771
  %v774 = vadd.f32 %v768, %v771
  %v775 = vld [vmem:[%s9] sm:$0xff]
  %v776 = vld [vmem:[%s9 + $0x8] sm:$0xff]
  %v777 = vld [vmem:[%s9 + $0x10] sm:$0xff]
  %v778 = vld [vmem:[%s9 + $0x18] sm:$0xff]
  %v779 = vld [vmem:[%s10] sm:$0x1]
  %v781 = vperm.slane %v779, 0
  %v784 = vsel %vm78, %v773, 0
  %v787 = vsel %vm78, %v774, 0
  %789 = vmatpush.msra.mxu0 0.0
  %790 = vmatpush.msra.mxu0 0.0
  %791 = vmatpush.msra.mxu0 0.0
  %792 = vmatpush.msra.mxu0 0.0
  %793 = vmatpush.msra.mxu0 0.0
  %794 = vmatpush.msra.mxu0 0.0
  %795 = vmatpush.msra.mxu0 0.0
  %796 = vmatpush.msra.mxu0 0.0
  %797 = vmatpush.msra.mxu0 0.0
  %798 = vmatpush.msra.mxu0 0.0
  %799 = vmatpush.msra.mxu0 0.0
  %800 = vmatpush.msra.mxu0 0.0
  %801 = vmatpush.msra.mxu0 %v778
  %802 = vmatpush.msra.mxu0 %v777
  %803 = vmatpush.msra.mxu0 %v776
  %804 = vmatpush.msra.mxu0 %v775
  %805 = vmatmul.f32.gmra.mxu0 %v784
  %v806 = vpop.f32.mrf.mxu0
  %v807 = vadd.f32 %v781, %v806
  %808 = vmatmul.f32.gmra.mxu0 %v787
  %v809 = vpop.f32.mrf.mxu0
  %v810 = vadd.f32 %v781, %v809
  %811 = vdwg.mxu0
  %v812 = vmul.f32 %v807, %v807
  %v813 = vmul.f32 %v810, %v810
  %v814 = vmul.f32 %v807, %v812
  %v815 = vmul.f32 %v810, %v813
  %v816 = vmul.f32 %v814, 0.044715
  %v817 = vmul.f32 %v815, 0.044715
  %v818 = vadd.f32 %v807, %v816
  %v819 = vadd.f32 %v810, %v817
  %v820 = vmul.f32 %v818, 0.7978846
  %v821 = vmul.f32 %v819, 0.7978846
  %v822 = vtanh.pop %v820
  %v823 = vtanh.pop %v821
  %v824 = vadd.f32 %v822, 1.0
  %v825 = vadd.f32 %v823, 1.0
  %v826 = vmul.f32 %v824, 0.5
  %v827 = vmul.f32 %v825, 0.5
  %v828 = vmul.f32 %v807, %v826
  %v829 = vmul.f32 %v810, %v827
  %v830 = vld [vmem:[%s11] sm:$0xff]
  %v831 = vld [vmem:[%s11 + $0x8] sm:$0xff]
  %v832 = vld [vmem:[%s11 + $0x10] sm:$0xff]
  %v833 = vld [vmem:[%s11 + $0x18] sm:$0xff]
  %v834 = vld [vmem:[%s11 + $0x20] sm:$0xff]
  %v835 = vld [vmem:[%s11 + $0x28] sm:$0xff]
  %v836 = vld [vmem:[%s11 + $0x30] sm:$0xff]
  %v837 = vld [vmem:[%s11 + $0x38] sm:$0xff]
  %v838 = vld [vmem:[%s12] sm:$0x1]
  %v840 = vperm.slane %v838, 0
  %vm842 = vcmask 523264
  %v844 = vsel %vm842, %v828, 0
  %v847 = vsel %vm842, %v829, 0
  %849 = vmatpush.msra.mxu0 0.0
  %850 = vmatpush.msra.mxu0 0.0
  %851 = vmatpush.msra.mxu0 0.0
  %852 = vmatpush.msra.mxu0 0.0
  %853 = vmatpush.msra.mxu0 0.0
  %854 = vmatpush.msra.mxu0 0.0
  %855 = vmatpush.msra.mxu0 0.0
  %856 = vmatpush.msra.mxu0 0.0
  %857 = vmatpush.msra.mxu0 %v837
  %858 = vmatpush.msra.mxu0 %v836
  %859 = vmatpush.msra.mxu0 %v835
  %860 = vmatpush.msra.mxu0 %v834
  %861 = vmatpush.msra.mxu0 %v833
  %862 = vmatpush.msra.mxu0 %v832
  %863 = vmatpush.msra.mxu0 %v831
  %864 = vmatpush.msra.mxu0 %v830
  %865 = vmatmul.f32.gmra.mxu0 %v844
  %v866 = vpop.f32.mrf.mxu0
  %v867 = vadd.f32 %v840, %v866
  %868 = vmatmul.f32.gmra.mxu0 %v847
  %v869 = vpop.f32.mrf.mxu0
  %v870 = vadd.f32 %v840, %v869
  %871 = vdwg.mxu0
  %v872 = vadd.f32 %v773, %v867
  %v873 = vadd.f32 %v774, %v870
  %v874 = vsel %vm78, %v872, 0.0
  %875 = vadd.xlane.f32.xlu0 %v874
  %v876 = vpop.xlane.xlu0 %875
  %v877 = vsel %vm78, %v873, 0.0
  %878 = vadd.xlane.f32.xlu0 %v877
  %v879 = vpop.xlane.xlu0 %878
  %v880 = vmul.f32 %v876, %v724
  %v881 = vmul.f32 %v879, %v724
  %v882 = vsub.f32 %v872, %v880
  %v883 = vsub.f32 %v873, %v881
  %v884 = vmul.f32 %v882, %v882
  %v885 = vmul.f32 %v883, %v883
  %v886 = vsel %vm78, %v884, 0.0
  %887 = vadd.xlane.f32.xlu0 %v886
  %v888 = vpop.xlane.xlu0 %887
  %v889 = vsel %vm78, %v885, 0.0
  %890 = vadd.xlane.f32.xlu0 %v889
  %v891 = vpop.xlane.xlu0 %890
  %v892 = vmul.f32 %v888, %v724
  %v893 = vmul.f32 %v891, %v724
  %v894 = vadd.f32 %v892, 1e-07
  %v895 = vadd.f32 %v893, 1e-07
  %v896 = vrsqrt.pop %v894
  %v897 = vmul.f32 %v896, %v894
  %v898 = vmul.f32 %v897, %v896
  %v899 = vmul.f32 0.5, %v898
  %v900 = vsub.f32 1.5, %v899
  %v901 = vmul.f32 %v896, %v900
  %vm902 = vweird.f32 %v894
  %vm903 = vweird.f32 %v896
  %vm904 = vmor %vm902, %vm903
  %v905 = vsel %vm904, %v896, %v901
  %v906 = vrsqrt.pop %v895
  %v907 = vmul.f32 %v906, %v895
  %v908 = vmul.f32 %v907, %v906
  %v909 = vmul.f32 0.5, %v908
  %v910 = vsub.f32 1.5, %v909
  %v911 = vmul.f32 %v906, %v910
  %vm912 = vweird.f32 %v895
  %vm913 = vweird.f32 %v906
  %vm914 = vmor %vm912, %vm913
  %v915 = vsel %vm914, %v906, %v911
  %v916 = vmul.f32 %v882, %v905
  %v917 = vmul.f32 %v883, %v915
  %v918 = vld [vmem:[%s13] sm:$0x1]
  %v920 = vperm.slane %v918, 0
  %v922 = vmul.f32 %v916, %v920
  %v923 = vmul.f32 %v917, %v920
  %v924 = vld [vmem:[%s14] sm:$0x1]
  %v926 = vperm.slane %v924, 0
  %v928 = vadd.f32 %v922, %v926
  %v929 = vadd.f32 %v923, %v926
  %s930 = scalar_lea.vmem %s3, 32
  %v931 = vld [vmem:[%s930] sm:$0xff]
  %v932 = vld [vmem:[%s930 + $0x8] sm:$0xff]
  %v933 = vld [vmem:[%s930 + $0x10] sm:$0xff]
  %v934 = vld [vmem:[%s930 + $0x18] sm:$0xff]
  %s935 = scalar_lea.vmem %s4, 1
  %v936 = vld [vmem:[%s935] sm:$0x1]
  %v938 = vperm.slane %v936, 0
  %v941 = vsel %vm78, %v928, 0
  %v944 = vsel %vm78, %v929, 0
  %946 = vmatpush.msra.mxu0 0.0
  %947 = vmatpush.msra.mxu0 0.0
  %948 = vmatpush.msra.mxu0 0.0
  %949 = vmatpush.msra.mxu0 0.0
  %950 = vmatpush.msra.mxu0 0.0
  %951 = vmatpush.msra.mxu0 0.0
  %952 = vmatpush.msra.mxu0 0.0
  %953 = vmatpush.msra.mxu0 0.0
  %954 = vmatpush.msra.mxu0 0.0
  %955 = vmatpush.msra.mxu0 0.0
  %956 = vmatpush.msra.mxu0 0.0
  %957 = vmatpush.msra.mxu0 0.0
  %958 = vmatpush.msra.mxu0 %v934
  %959 = vmatpush.msra.mxu0 %v933
  %960 = vmatpush.msra.mxu0 %v932
  %961 = vmatpush.msra.mxu0 %v931
  %962 = vmatmul.f32.gmra.mxu0 %v941
  %v963 = vpop.f32.mrf.mxu0
  %v964 = vadd.f32 %v938, %v963
  %965 = vmatmul.f32.gmra.mxu0 %v944
  %v966 = vpop.f32.mrf.mxu0
  %v967 = vadd.f32 %v938, %v966
  %968 = vdwg.mxu0
  %v969 = vmul.f32 %v964, %v109
  %v970 = vmul.f32 %v967, %v109
  %972 = vrot.lane.b32.xlu0 %v964, 96
  %v973 = vpop.permute.xlu0 %972
  %v975 = vsel %vm78, %v969, 0
  %v977 = vsel %vm78, %v973, 0
  %979 = vmatpush.xpose.msra.mxu0 0.0
  %980 = vmatpush.xpose.msra.mxu0 0.0
  %981 = vmatpush.xpose.msra.mxu0 0.0
  %982 = vmatpush.xpose.msra.mxu0 0.0
  %983 = vmatpush.xpose.msra.mxu0 0.0
  %984 = vmatpush.xpose.msra.mxu0 0.0
  %985 = vmatpush.xpose.msra.mxu0 0.0
  %986 = vmatpush.xpose.msra.mxu0 0.0
  %987 = vmatpush.xpose.msra.mxu0 0.0
  %988 = vmatpush.xpose.msra.mxu0 0.0
  %989 = vmatpush.xpose.msra.mxu0 0.0
  %990 = vmatpush.xpose.msra.mxu0 0.0
  %991 = vmatpush.xpose.msra.mxu0 0.0
  %992 = vmatpush.xpose.msra.mxu0 0.0
  %993 = vmatpush.xpose.msra.mxu0 0.0
  %994 = vmatpush.xpose.msra.mxu0 %v977
  %995 = vmatmul.f32.gmra.mxu0 %v975
  %v996 = vpop.f32.mrf.mxu0
  %v997 = vadd.f32 0.0, %v996
  %998 = vdwg.mxu0
  %1000 = vrot.lane.b32.xlu0 %v967, 96
  %v1001 = vpop.permute.xlu0 %1000
  %v1003 = vsel %vm78, %v970, 0
  %v1005 = vsel %vm78, %v1001, 0
  %1007 = vmatpush.xpose.msra.mxu0 0.0
  %1008 = vmatpush.xpose.msra.mxu0 0.0
  %1009 = vmatpush.xpose.msra.mxu0 0.0
  %1010 = vmatpush.xpose.msra.mxu0 0.0
  %1011 = vmatpush.xpose.msra.mxu0 0.0
  %1012 = vmatpush.xpose.msra.mxu0 0.0
  %1013 = vmatpush.xpose.msra.mxu0 0.0
  %1014 = vmatpush.xpose.msra.mxu0 0.0
  %1015 = vmatpush.xpose.msra.mxu0 0.0
  %1016 = vmatpush.xpose.msra.mxu0 0.0
  %1017 = vmatpush.xpose.msra.mxu0 0.0
  %1018 = vmatpush.xpose.msra.mxu0 0.0
  %1019 = vmatpush.xpose.msra.mxu0 0.0
  %1020 = vmatpush.xpose.msra.mxu0 0.0
  %1021 = vmatpush.xpose.msra.mxu0 0.0
  %1022 = vmatpush.xpose.msra.mxu0 %v1005
  %1023 = vmatmul.f32.gmra.mxu0 %v1003
  %v1024 = vpop.f32.mrf.mxu0
  %v1025 = vadd.f32 0.0, %v1024
  %1026 = vdwg.mxu0
  %v1027 = vmul.f32 %v997, 0.35355338
  %v1028 = vmul.f32 %v1025, 0.35355338
  %v1029 = vadd.f32 %v1027, %v173
  %v1030 = vadd.f32 %v1028, %v174
  %v1031 = vsel %vm179, %v1029, -inf
  %1032 = vmax.xlane.f32.xlu0 %v1031
  %v1033 = vpop.xlane.xlu0 %1032
  %v1034 = vsel %vm179, %v1030, -inf
  %1035 = vmax.xlane.f32.xlu0 %v1034
  %v1036 = vpop.xlane.xlu0 %1035
  %v1037 = vsub.f32 %v1029, %v1033
  %v1038 = vsub.f32 %v1030, %v1036
  %v1039 = vmul.f32 %v1037, 1.442695
  %v1040 = vpow.pop %v1039
  %v1041 = vmul.f32 %v1038, 1.442695
  %v1042 = vpow.pop %v1041
  %v1043 = vsel %vm179, %v1040, 0.0
  %1044 = vadd.xlane.f32.xlu0 %v1043
  %v1045 = vpop.xlane.xlu0 %1044
  %v1046 = vsel %vm179, %v1042, 0.0
  %1047 = vadd.xlane.f32.xlu0 %v1046
  %v1048 = vpop.xlane.xlu0 %1047
  %v1049 = vrcp.pop %v1045
  %v1050 = vrcp.pop %v1048
  %v1051 = vmul.f32 %v1040, %v1049
  %v1052 = vmul.f32 %v1042, %v1050
  %v1053 = vmul.f32 %v964, %v203
  %v1054 = vmul.f32 %v967, %v203
  %v1055 = vmul.f32 %v964, %v208
  %v1056 = vmul.f32 %v967, %v208
  %v1058 = vsel %vm78, %v1055, 0
  %1060 = vmatpush.xpose.msra.mxu0 0.0
  %1061 = vmatpush.xpose.msra.mxu0 0.0
  %1062 = vmatpush.xpose.msra.mxu0 0.0
  %1063 = vmatpush.xpose.msra.mxu0 0.0
  %1064 = vmatpush.xpose.msra.mxu0 0.0
  %1065 = vmatpush.xpose.msra.mxu0 0.0
  %1066 = vmatpush.xpose.msra.mxu0 0.0
  %1067 = vmatpush.xpose.msra.mxu0 0.0
  %1068 = vmatpush.xpose.msra.mxu0 0.0
  %1069 = vmatpush.xpose.msra.mxu0 0.0
  %1070 = vmatpush.xpose.msra.mxu0 0.0
  %1071 = vmatpush.xpose.msra.mxu0 0.0
  %1072 = vmatpush.xpose.msra.mxu0 0.0
  %1073 = vmatpush.xpose.msra.mxu0 0.0
  %1074 = vmatpush.xpose.msra.mxu0 0.0
  %1075 = vmatpush.xpose.msra.mxu0 %v977
  %1076 = vmatmul.f32.gmra.mxu0 %v1058
  %v1077 = vpop.f32.mrf.mxu0
  %v1078 = vadd.f32 0.0, %v1077
  %1079 = vdwg.mxu0
  %v1081 = vsel %vm78, %v1056, 0
  %1083 = vmatpush.xpose.msra.mxu0 0.0
  %1084 = vmatpush.xpose.msra.mxu0 0.0
  %1085 = vmatpush.xpose.msra.mxu0 0.0
  %1086 = vmatpush.xpose.msra.mxu0 0.0
  %1087 = vmatpush.xpose.msra.mxu0 0.0
  %1088 = vmatpush.xpose.msra.mxu0 0.0
  %1089 = vmatpush.xpose.msra.mxu0 0.0
  %1090 = vmatpush.xpose.msra.mxu0 0.0
  %1091 = vmatpush.xpose.msra.mxu0 0.0
  %1092 = vmatpush.xpose.msra.mxu0 0.0
  %1093 = vmatpush.xpose.msra.mxu0 0.0
  %1094 = vmatpush.xpose.msra.mxu0 0.0
  %1095 = vmatpush.xpose.msra.mxu0 0.0
  %1096 = vmatpush.xpose.msra.mxu0 0.0
  %1097 = vmatpush.xpose.msra.mxu0 0.0
  %1098 = vmatpush.xpose.msra.mxu0 %v1005
  %1099 = vmatmul.f32.gmra.mxu0 %v1081
  %v1100 = vpop.f32.mrf.mxu0
  %v1101 = vadd.f32 0.0, %v1100
  %1102 = vdwg.mxu0
  %v1103 = vmul.f32 %v1078, 0.35355338
  %v1104 = vmul.f32 %v1101, 0.35355338
  %v1105 = vadd.f32 %v1103, %v173
  %v1106 = vadd.f32 %v1104, %v174
  %v1107 = vsel %vm179, %v1105, -inf
  %1108 = vmax.xlane.f32.xlu0 %v1107
  %v1109 = vpop.xlane.xlu0 %1108
  %v1110 = vsel %vm179, %v1106, -inf
  %1111 = vmax.xlane.f32.xlu0 %v1110
  %v1112 = vpop.xlane.xlu0 %1111
  %v1113 = vsub.f32 %v1105, %v1109
  %v1114 = vsub.f32 %v1106, %v1112
  %v1115 = vmul.f32 %v1113, 1.442695
  %v1116 = vpow.pop %v1115
  %v1117 = vmul.f32 %v1114, 1.442695
  %v1118 = vpow.pop %v1117
  %v1119 = vsel %vm179, %v1116, 0.0
  %1120 = vadd.xlane.f32.xlu0 %v1119
  %v1121 = vpop.xlane.xlu0 %1120
  %v1122 = vsel %vm179, %v1118, 0.0
  %1123 = vadd.xlane.f32.xlu0 %v1122
  %v1124 = vpop.xlane.xlu0 %1123
  %v1125 = vrcp.pop %v1121
  %v1126 = vrcp.pop %v1124
  %v1127 = vmul.f32 %v1116, %v1125
  %v1128 = vmul.f32 %v1118, %v1126
  %v1129 = vmul.f32 %v964, %v285
  %v1130 = vmul.f32 %v967, %v285
  %1132 = vrot.lane.b32.xlu0 %v1129, 64
  %v1133 = vpop.permute.xlu0 %1132
  %v1136 = vsel %vm179, %v1127, 0
  %1138 = vmatpush.msra.mxu0 0.0
  %1139 = vmatpush.msra.mxu0 0.0
  %1140 = vmatpush.msra.mxu0 0.0
  %1141 = vmatpush.msra.mxu0 0.0
  %1142 = vmatpush.msra.mxu0 0.0
  %1143 = vmatpush.msra.mxu0 0.0
  %1144 = vmatpush.msra.mxu0 0.0
  %1145 = vmatpush.msra.mxu0 0.0
  %1146 = vmatpush.msra.mxu0 0.0
  %1147 = vmatpush.msra.mxu0 0.0
  %1148 = vmatpush.msra.mxu0 0.0
  %1149 = vmatpush.msra.mxu0 0.0
  %1150 = vmatpush.msra.mxu0 0.0
  %1151 = vmatpush.msra.mxu0 0.0
  %1152 = vmatpush.msra.mxu0 0.0
  %1153 = vmatpush.msra.mxu0 %v1133
  %1154 = vmatmul.f32.gmra.mxu0 %v1136
  %v1155 = vpop.f32.mrf.mxu0
  %v1156 = vadd.f32 0.0, %v1155
  %1157 = vdwg.mxu0
  %1159 = vrot.lane.b32.xlu0 %v1130, 64
  %v1160 = vpop.permute.xlu0 %1159
  %v1163 = vsel %vm179, %v1128, 0
  %1165 = vmatpush.msra.mxu0 0.0
  %1166 = vmatpush.msra.mxu0 0.0
  %1167 = vmatpush.msra.mxu0 0.0
  %1168 = vmatpush.msra.mxu0 0.0
  %1169 = vmatpush.msra.mxu0 0.0
  %1170 = vmatpush.msra.mxu0 0.0
  %1171 = vmatpush.msra.mxu0 0.0
  %1172 = vmatpush.msra.mxu0 0.0
  %1173 = vmatpush.msra.mxu0 0.0
  %1174 = vmatpush.msra.mxu0 0.0
  %1175 = vmatpush.msra.mxu0 0.0
  %1176 = vmatpush.msra.mxu0 0.0
  %1177 = vmatpush.msra.mxu0 0.0
  %1178 = vmatpush.msra.mxu0 0.0
  %1179 = vmatpush.msra.mxu0 0.0
  %1180 = vmatpush.msra.mxu0 %v1160
  %1181 = vmatmul.f32.gmra.mxu0 %v1163
  %v1182 = vpop.f32.mrf.mxu0
  %v1183 = vadd.f32 0.0, %v1182
  %1184 = vdwg.mxu0
  %1186 = vrot.lane.b32.xlu0 %v1053, 64
  %v1187 = vpop.permute.xlu0 %1186
  %v1190 = vsel %vm179, %v1051, 0
  %1192 = vmatpush.msra.mxu0 0.0
  %1193 = vmatpush.msra.mxu0 0.0
  %1194 = vmatpush.msra.mxu0 0.0
  %1195 = vmatpush.msra.mxu0 0.0
  %1196 = vmatpush.msra.mxu0 0.0
  %1197 = vmatpush.msra.mxu0 0.0
  %1198 = vmatpush.msra.mxu0 0.0
  %1199 = vmatpush.msra.mxu0 0.0
  %1200 = vmatpush.msra.mxu0 0.0
  %1201 = vmatpush.msra.mxu0 0.0
  %1202 = vmatpush.msra.mxu0 0.0
  %1203 = vmatpush.msra.mxu0 0.0
  %1204 = vmatpush.msra.mxu0 0.0
  %1205 = vmatpush.msra.mxu0 0.0
  %1206 = vmatpush.msra.mxu0 0.0
  %1207 = vmatpush.msra.mxu0 %v1187
  %1208 = vmatmul.f32.gmra.mxu0 %v1190
  %v1209 = vpop.f32.mrf.mxu0
  %v1210 = vadd.f32 %v1156, %v1209
  %1211 = vdwg.mxu0
  %1213 = vrot.lane.b32.xlu0 %v1054, 64
  %v1214 = vpop.permute.xlu0 %1213
  %v1217 = vsel %vm179, %v1052, 0
  %1219 = vmatpush.msra.mxu0 0.0
  %1220 = vmatpush.msra.mxu0 0.0
  %1221 = vmatpush.msra.mxu0 0.0
  %1222 = vmatpush.msra.mxu0 0.0
  %1223 = vmatpush.msra.mxu0 0.0
  %1224 = vmatpush.msra.mxu0 0.0
  %1225 = vmatpush.msra.mxu0 0.0
  %1226 = vmatpush.msra.mxu0 0.0
  %1227 = vmatpush.msra.mxu0 0.0
  %1228 = vmatpush.msra.mxu0 0.0
  %1229 = vmatpush.msra.mxu0 0.0
  %1230 = vmatpush.msra.mxu0 0.0
  %1231 = vmatpush.msra.mxu0 0.0
  %1232 = vmatpush.msra.mxu0 0.0
  %1233 = vmatpush.msra.mxu0 0.0
  %1234 = vmatpush.msra.mxu0 %v1214
  %1235 = vmatmul.f32.gmra.mxu0 %v1217
  %v1236 = vpop.f32.mrf.mxu0
  %v1237 = vadd.f32 %v1183, %v1236
  %1238 = vdwg.mxu0
  %v1239 = vmul.f32 %v964, %v398
  %v1240 = vmul.f32 %v967, %v398
  %v1242 = vsel %vm78, %v1239, 0
  %1244 = vmatpush.xpose.msra.mxu0 0.0
  %1245 = vmatpush.xpose.msra.mxu0 0.0
  %1246 = vmatpush.xpose.msra.mxu0 0.0
  %1247 = vmatpush.xpose.msra.mxu0 0.0
  %1248 = vmatpush.xpose.msra.mxu0 0.0
  %1249 = vmatpush.xpose.msra.mxu0 0.0
  %1250 = vmatpush.xpose.msra.mxu0 0.0
  %1251 = vmatpush.xpose.msra.mxu0 0.0
  %1252 = vmatpush.xpose.msra.mxu0 0.0
  %1253 = vmatpush.xpose.msra.mxu0 0.0
  %1254 = vmatpush.xpose.msra.mxu0 0.0
  %1255 = vmatpush.xpose.msra.mxu0 0.0
  %1256 = vmatpush.xpose.msra.mxu0 0.0
  %1257 = vmatpush.xpose.msra.mxu0 0.0
  %1258 = vmatpush.xpose.msra.mxu0 0.0
  %1259 = vmatpush.xpose.msra.mxu0 %v977
  %1260 = vmatmul.f32.gmra.mxu0 %v1242
  %v1261 = vpop.f32.mrf.mxu0
  %v1262 = vadd.f32 0.0, %v1261
  %1263 = vdwg.mxu0
  %v1265 = vsel %vm78, %v1240, 0
  %1267 = vmatpush.xpose.msra.mxu0 0.0
  %1268 = vmatpush.xpose.msra.mxu0 0.0
  %1269 = vmatpush.xpose.msra.mxu0 0.0
  %1270 = vmatpush.xpose.msra.mxu0 0.0
  %1271 = vmatpush.xpose.msra.mxu0 0.0
  %1272 = vmatpush.xpose.msra.mxu0 0.0
  %1273 = vmatpush.xpose.msra.mxu0 0.0
  %1274 = vmatpush.xpose.msra.mxu0 0.0
  %1275 = vmatpush.xpose.msra.mxu0 0.0
  %1276 = vmatpush.xpose.msra.mxu0 0.0
  %1277 = vmatpush.xpose.msra.mxu0 0.0
  %1278 = vmatpush.xpose.msra.mxu0 0.0
  %1279 = vmatpush.xpose.msra.mxu0 0.0
  %1280 = vmatpush.xpose.msra.mxu0 0.0
  %1281 = vmatpush.xpose.msra.mxu0 0.0
  %1282 = vmatpush.xpose.msra.mxu0 %v1005
  %1283 = vmatmul.f32.gmra.mxu0 %v1265
  %v1284 = vpop.f32.mrf.mxu0
  %v1285 = vadd.f32 0.0, %v1284
  %1286 = vdwg.mxu0
  %v1287 = vmul.f32 %v1262, 0.35355338
  %v1288 = vmul.f32 %v1285, 0.35355338
  %v1289 = vadd.f32 %v1287, %v173
  %v1290 = vadd.f32 %v1288, %v174
  %v1291 = vsel %vm179, %v1289, -inf
  %1292 = vmax.xlane.f32.xlu0 %v1291
  %v1293 = vpop.xlane.xlu0 %1292
  %v1294 = vsel %vm179, %v1290, -inf
  %1295 = vmax.xlane.f32.xlu0 %v1294
  %v1296 = vpop.xlane.xlu0 %1295
  %v1297 = vsub.f32 %v1289, %v1293
  %v1298 = vsub.f32 %v1290, %v1296
  %v1299 = vmul.f32 %v1297, 1.442695
  %v1300 = vpow.pop %v1299
  %v1301 = vmul.f32 %v1298, 1.442695
  %v1302 = vpow.pop %v1301
  %v1303 = vsel %vm179, %v1300, 0.0
  %1304 = vadd.xlane.f32.xlu0 %v1303
  %v1305 = vpop.xlane.xlu0 %1304
  %v1306 = vsel %vm179, %v1302, 0.0
  %1307 = vadd.xlane.f32.xlu0 %v1306
  %v1308 = vpop.xlane.xlu0 %1307
  %v1309 = vrcp.pop %v1305
  %v1310 = vrcp.pop %v1308
  %v1311 = vmul.f32 %v1300, %v1309
  %v1312 = vmul.f32 %v1302, %v1310
  %v1313 = vmul.f32 %v964, %v475
  %v1314 = vmul.f32 %v967, %v475
  %1316 = vrot.lane.b32.xlu0 %v1313, 64
  %v1317 = vpop.permute.xlu0 %1316
  %v1320 = vsel %vm179, %v1311, 0
  %1322 = vmatpush.msra.mxu0 0.0
  %1323 = vmatpush.msra.mxu0 0.0
  %1324 = vmatpush.msra.mxu0 0.0
  %1325 = vmatpush.msra.mxu0 0.0
  %1326 = vmatpush.msra.mxu0 0.0
  %1327 = vmatpush.msra.mxu0 0.0
  %1328 = vmatpush.msra.mxu0 0.0
  %1329 = vmatpush.msra.mxu0 0.0
  %1330 = vmatpush.msra.mxu0 0.0
  %1331 = vmatpush.msra.mxu0 0.0
  %1332 = vmatpush.msra.mxu0 0.0
  %1333 = vmatpush.msra.mxu0 0.0
  %1334 = vmatpush.msra.mxu0 0.0
  %1335 = vmatpush.msra.mxu0 0.0
  %1336 = vmatpush.msra.mxu0 0.0
  %1337 = vmatpush.msra.mxu0 %v1317
  %1338 = vmatmul.f32.gmra.mxu0 %v1320
  %v1339 = vpop.f32.mrf.mxu0
  %v1340 = vadd.f32 0.0, %v1339
  %1341 = vdwg.mxu0
  %1343 = vrot.lane.b32.xlu0 %v1314, 64
  %v1344 = vpop.permute.xlu0 %1343
  %v1347 = vsel %vm179, %v1312, 0
  %1349 = vmatpush.msra.mxu0 0.0
  %1350 = vmatpush.msra.mxu0 0.0
  %1351 = vmatpush.msra.mxu0 0.0
  %1352 = vmatpush.msra.mxu0 0.0
  %1353 = vmatpush.msra.mxu0 0.0
  %1354 = vmatpush.msra.mxu0 0.0
  %1355 = vmatpush.msra.mxu0 0.0
  %1356 = vmatpush.msra.mxu0 0.0
  %1357 = vmatpush.msra.mxu0 0.0
  %1358 = vmatpush.msra.mxu0 0.0
  %1359 = vmatpush.msra.mxu0 0.0
  %1360 = vmatpush.msra.mxu0 0.0
  %1361 = vmatpush.msra.mxu0 0.0
  %1362 = vmatpush.msra.mxu0 0.0
  %1363 = vmatpush.msra.mxu0 0.0
  %1364 = vmatpush.msra.mxu0 %v1344
  %1365 = vmatmul.f32.gmra.mxu0 %v1347
  %v1366 = vpop.f32.mrf.mxu0
  %v1367 = vadd.f32 0.0, %v1366
  %1368 = vdwg.mxu0
  %v1369 = vadd.f32 %v1210, %v1340
  %v1370 = vadd.f32 %v1237, %v1367
  %v1371 = vmul.f32 %v964, %v536
  %v1372 = vmul.f32 %v967, %v536
  %v1374 = vsel %vm78, %v1371, 0
  %1376 = vmatpush.xpose.msra.mxu0 0.0
  %1377 = vmatpush.xpose.msra.mxu0 0.0
  %1378 = vmatpush.xpose.msra.mxu0 0.0
  %1379 = vmatpush.xpose.msra.mxu0 0.0
  %1380 = vmatpush.xpose.msra.mxu0 0.0
  %1381 = vmatpush.xpose.msra.mxu0 0.0
  %1382 = vmatpush.xpose.msra.mxu0 0.0
  %1383 = vmatpush.xpose.msra.mxu0 0.0
  %1384 = vmatpush.xpose.msra.mxu0 0.0
  %1385 = vmatpush.xpose.msra.mxu0 0.0
  %1386 = vmatpush.xpose.msra.mxu0 0.0
  %1387 = vmatpush.xpose.msra.mxu0 0.0
  %1388 = vmatpush.xpose.msra.mxu0 0.0
  %1389 = vmatpush.xpose.msra.mxu0 0.0
  %1390 = vmatpush.xpose.msra.mxu0 0.0
  %1391 = vmatpush.xpose.msra.mxu0 %v977
  %1392 = vmatmul.f32.gmra.mxu0 %v1374
  %v1393 = vpop.f32.mrf.mxu0
  %v1394 = vadd.f32 0.0, %v1393
  %1395 = vdwg.mxu0
  %v1397 = vsel %vm78, %v1372, 0
  %1399 = vmatpush.xpose.msra.mxu0 0.0
  %1400 = vmatpush.xpose.msra.mxu0 0.0
  %1401 = vmatpush.xpose.msra.mxu0 0.0
  %1402 = vmatpush.xpose.msra.mxu0 0.0
  %1403 = vmatpush.xpose.msra.mxu0 0.0
  %1404 = vmatpush.xpose.msra.mxu0 0.0
  %1405 = vmatpush.xpose.msra.mxu0 0.0
  %1406 = vmatpush.xpose.msra.mxu0 0.0
  %1407 = vmatpush.xpose.msra.mxu0 0.0
  %1408 = vmatpush.xpose.msra.mxu0 0.0
  %1409 = vmatpush.xpose.msra.mxu0 0.0
  %1410 = vmatpush.xpose.msra.mxu0 0.0
  %1411 = vmatpush.xpose.msra.mxu0 0.0
  %1412 = vmatpush.xpose.msra.mxu0 0.0
  %1413 = vmatpush.xpose.msra.mxu0 0.0
  %1414 = vmatpush.xpose.msra.mxu0 %v1005
  %1415 = vmatmul.f32.gmra.mxu0 %v1397
  %v1416 = vpop.f32.mrf.mxu0
  %v1417 = vadd.f32 0.0, %v1416
  %1418 = vdwg.mxu0
  %v1419 = vmul.f32 %v1394, 0.35355338
  %v1420 = vmul.f32 %v1417, 0.35355338
  %v1421 = vadd.f32 %v1419, %v173
  %v1422 = vadd.f32 %v1420, %v174
  %v1423 = vsel %vm179, %v1421, -inf
  %1424 = vmax.xlane.f32.xlu0 %v1423
  %v1425 = vpop.xlane.xlu0 %1424
  %v1426 = vsel %vm179, %v1422, -inf
  %1427 = vmax.xlane.f32.xlu0 %v1426
  %v1428 = vpop.xlane.xlu0 %1427
  %v1429 = vsub.f32 %v1421, %v1425
  %v1430 = vsub.f32 %v1422, %v1428
  %v1431 = vmul.f32 %v1429, 1.442695
  %v1432 = vpow.pop %v1431
  %v1433 = vmul.f32 %v1430, 1.442695
  %v1434 = vpow.pop %v1433
  %v1435 = vsel %vm179, %v1432, 0.0
  %1436 = vadd.xlane.f32.xlu0 %v1435
  %v1437 = vpop.xlane.xlu0 %1436
  %v1438 = vsel %vm179, %v1434, 0.0
  %1439 = vadd.xlane.f32.xlu0 %v1438
  %v1440 = vpop.xlane.xlu0 %1439
  %v1441 = vrcp.pop %v1437
  %v1442 = vrcp.pop %v1440
  %v1443 = vmul.f32 %v1432, %v1441
  %v1444 = vmul.f32 %v1434, %v1442
  %v1445 = vmul.f32 %v964, %v613
  %v1446 = vmul.f32 %v967, %v613
  %1448 = vrot.lane.b32.xlu0 %v1445, 64
  %v1449 = vpop.permute.xlu0 %1448
  %v1452 = vsel %vm179, %v1443, 0
  %1454 = vmatpush.msra.mxu0 0.0
  %1455 = vmatpush.msra.mxu0 0.0
  %1456 = vmatpush.msra.mxu0 0.0
  %1457 = vmatpush.msra.mxu0 0.0
  %1458 = vmatpush.msra.mxu0 0.0
  %1459 = vmatpush.msra.mxu0 0.0
  %1460 = vmatpush.msra.mxu0 0.0
  %1461 = vmatpush.msra.mxu0 0.0
  %1462 = vmatpush.msra.mxu0 0.0
  %1463 = vmatpush.msra.mxu0 0.0
  %1464 = vmatpush.msra.mxu0 0.0
  %1465 = vmatpush.msra.mxu0 0.0
  %1466 = vmatpush.msra.mxu0 0.0
  %1467 = vmatpush.msra.mxu0 0.0
  %1468 = vmatpush.msra.mxu0 0.0
  %1469 = vmatpush.msra.mxu0 %v1449
  %1470 = vmatmul.f32.gmra.mxu0 %v1452
  %v1471 = vpop.f32.mrf.mxu0
  %v1472 = vadd.f32 0.0, %v1471
  %1473 = vdwg.mxu0
  %1475 = vrot.lane.b32.xlu0 %v1446, 64
  %v1476 = vpop.permute.xlu0 %1475
  %v1479 = vsel %vm179, %v1444, 0
  %1481 = vmatpush.msra.mxu0 0.0
  %1482 = vmatpush.msra.mxu0 0.0
  %1483 = vmatpush.msra.mxu0 0.0
  %1484 = vmatpush.msra.mxu0 0.0
  %1485 = vmatpush.msra.mxu0 0.0
  %1486 = vmatpush.msra.mxu0 0.0
  %1487 = vmatpush.msra.mxu0 0.0
  %1488 = vmatpush.msra.mxu0 0.0
  %1489 = vmatpush.msra.mxu0 0.0
  %1490 = vmatpush.msra.mxu0 0.0
  %1491 = vmatpush.msra.mxu0 0.0
  %1492 = vmatpush.msra.mxu0 0.0
  %1493 = vmatpush.msra.mxu0 0.0
  %1494 = vmatpush.msra.mxu0 0.0
  %1495 = vmatpush.msra.mxu0 0.0
  %1496 = vmatpush.msra.mxu0 %v1476
  %1497 = vmatmul.f32.gmra.mxu0 %v1479
  %v1498 = vpop.f32.mrf.mxu0
  %v1499 = vadd.f32 0.0, %v1498
  %1500 = vdwg.mxu0
  %v1501 = vadd.f32 %v1369, %v1472
  %v1502 = vadd.f32 %v1370, %v1499
  %s1503 = scalar_lea.vmem %s5, 32
  %v1504 = vld [vmem:[%s1503] sm:$0xff]
  %v1505 = vld [vmem:[%s1503 + $0x8] sm:$0xff]
  %v1506 = vld [vmem:[%s1503 + $0x10] sm:$0xff]
  %v1507 = vld [vmem:[%s1503 + $0x18] sm:$0xff]
  %s1508 = scalar_lea.vmem %s6, 1
  %v1509 = vld [vmem:[%s1508] sm:$0x1]
  %v1511 = vperm.slane %v1509, 0
  %v1514 = vsel %vm78, %v1501, 0
  %v1517 = vsel %vm78, %v1502, 0
  %1519 = vmatpush.msra.mxu0 0.0
  %1520 = vmatpush.msra.mxu0 0.0
  %1521 = vmatpush.msra.mxu0 0.0
  %1522 = vmatpush.msra.mxu0 0.0
  %1523 = vmatpush.msra.mxu0 0.0
  %1524 = vmatpush.msra.mxu0 0.0
  %1525 = vmatpush.msra.mxu0 0.0
  %1526 = vmatpush.msra.mxu0 0.0
  %1527 = vmatpush.msra.mxu0 0.0
  %1528 = vmatpush.msra.mxu0 0.0
  %1529 = vmatpush.msra.mxu0 0.0
  %1530 = vmatpush.msra.mxu0 0.0
  %1531 = vmatpush.msra.mxu0 %v1507
  %1532 = vmatpush.msra.mxu0 %v1506
  %1533 = vmatpush.msra.mxu0 %v1505
  %1534 = vmatpush.msra.mxu0 %v1504
  %1535 = vmatmul.f32.gmra.mxu0 %v1514
  %v1536 = vpop.f32.mrf.mxu0
  %v1537 = vadd.f32 %v1511, %v1536
  %1538 = vmatmul.f32.gmra.mxu0 %v1517
  %v1539 = vpop.f32.mrf.mxu0
  %v1540 = vadd.f32 %v1511, %v1539
  %1541 = vdwg.mxu0
  %v1542 = vadd.f32 %v928, %v1537
  %v1543 = vadd.f32 %v929, %v1540
  %v1544 = vsel %vm78, %v1542, 0.0
  %1545 = vadd.xlane.f32.xlu0 %v1544
  %v1546 = vpop.xlane.xlu0 %1545
  %v1547 = vsel %vm78, %v1543, 0.0
  %1548 = vadd.xlane.f32.xlu0 %v1547
  %v1549 = vpop.xlane.xlu0 %1548
  %v1550 = vmul.f32 %v1546, %v724
  %v1551 = vmul.f32 %v1549, %v724
  %v1552 = vsub.f32 %v1542, %v1550
  %v1553 = vsub.f32 %v1543, %v1551
  %v1554 = vmul.f32 %v1552, %v1552
  %v1555 = vmul.f32 %v1553, %v1553
  %v1556 = vsel %vm78, %v1554, 0.0
  %1557 = vadd.xlane.f32.xlu0 %v1556
  %v1558 = vpop.xlane.xlu0 %1557
  %v1559 = vsel %vm78, %v1555, 0.0
  %1560 = vadd.xlane.f32.xlu0 %v1559
  %v1561 = vpop.xlane.xlu0 %1560
  %v1562 = vmul.f32 %v1558, %v724
  %v1563 = vmul.f32 %v1561, %v724
  %v1564 = vadd.f32 %v1562, 1e-07
  %v1565 = vadd.f32 %v1563, 1e-07
  %v1566 = vrsqrt.pop %v1564
  %v1567 = vmul.f32 %v1566, %v1564
  %v1568 = vmul.f32 %v1567, %v1566
  %v1569 = vmul.f32 0.5, %v1568
  %v1570 = vsub.f32 1.5, %v1569
  %v1571 = vmul.f32 %v1566, %v1570
  %vm1572 = vweird.f32 %v1564
  %vm1573 = vweird.f32 %v1566
  %vm1574 = vmor %vm1572, %vm1573
  %v1575 = vsel %vm1574, %v1566, %v1571
  %v1576 = vrsqrt.pop %v1565
  %v1577 = vmul.f32 %v1576, %v1565
  %v1578 = vmul.f32 %v1577, %v1576
  %v1579 = vmul.f32 0.5, %v1578
  %v1580 = vsub.f32 1.5, %v1579
  %v1581 = vmul.f32 %v1576, %v1580
  %vm1582 = vweird.f32 %v1565
  %vm1583 = vweird.f32 %v1576
  %vm1584 = vmor %vm1582, %vm1583
  %v1585 = vsel %vm1584, %v1576, %v1581
  %v1586 = vmul.f32 %v1552, %v1575
  %v1587 = vmul.f32 %v1553, %v1585
  %s1588 = scalar_lea.vmem %s7, 1
  %v1589 = vld [vmem:[%s1588] sm:$0x1]
  %v1591 = vperm.slane %v1589, 0
  %v1593 = vmul.f32 %v1586, %v1591
  %v1594 = vmul.f32 %v1587, %v1591
  %s1595 = scalar_lea.vmem %s8, 1
  %v1596 = vld [vmem:[%s1595] sm:$0x1]
  %v1598 = vperm.slane %v1596, 0
  %v1600 = vadd.f32 %v1593, %v1598
  %v1601 = vadd.f32 %v1594, %v1598
  %s1602 = scalar_lea.vmem %s9, 32
  %v1603 = vld [vmem:[%s1602] sm:$0xff]
  %v1604 = vld [vmem:[%s1602 + $0x8] sm:$0xff]
  %v1605 = vld [vmem:[%s1602 + $0x10] sm:$0xff]
  %v1606 = vld [vmem:[%s1602 + $0x18] sm:$0xff]
  %s1607 = scalar_lea.vmem %s10, 1
  %v1608 = vld [vmem:[%s1607] sm:$0x1]
  %v1610 = vperm.slane %v1608, 0
  %v1613 = vsel %vm78, %v1600, 0
  %v1616 = vsel %vm78, %v1601, 0
  %1618 = vmatpush.msra.mxu0 0.0
  %1619 = vmatpush.msra.mxu0 0.0
  %1620 = vmatpush.msra.mxu0 0.0
  %1621 = vmatpush.msra.mxu0 0.0
  %1622 = vmatpush.msra.mxu0 0.0
  %1623 = vmatpush.msra.mxu0 0.0
  %1624 = vmatpush.msra.mxu0 0.0
  %1625 = vmatpush.msra.mxu0 0.0
  %1626 = vmatpush.msra.mxu0 0.0
  %1627 = vmatpush.msra.mxu0 0.0
  %1628 = vmatpush.msra.mxu0 0.0
  %1629 = vmatpush.msra.mxu0 0.0
  %1630 = vmatpush.msra.mxu0 %v1606
  %1631 = vmatpush.msra.mxu0 %v1605
  %1632 = vmatpush.msra.mxu0 %v1604
  %1633 = vmatpush.msra.mxu0 %v1603
  %1634 = vmatmul.f32.gmra.mxu0 %v1613
  %v1635 = vpop.f32.mrf.mxu0
  %v1636 = vadd.f32 %v1610, %v1635
  %1637 = vmatmul.f32.gmra.mxu0 %v1616
  %v1638 = vpop.f32.mrf.mxu0
  %v1639 = vadd.f32 %v1610, %v1638
  %1640 = vdwg.mxu0
  %v1641 = vmul.f32 %v1636, %v1636
  %v1642 = vmul.f32 %v1639, %v1639
  %v1643 = vmul.f32 %v1636, %v1641
  %v1644 = vmul.f32 %v1639, %v1642
  %v1645 = vmul.f32 %v1643, 0.044715
  %v1646 = vmul.f32 %v1644, 0.044715
  %v1647 = vadd.f32 %v1636, %v1645
  %v1648 = vadd.f32 %v1639, %v1646
  %v1649 = vmul.f32 %v1647, 0.7978846
  %v1650 = vmul.f32 %v1648, 0.7978846
  %v1651 = vtanh.pop %v1649
  %v1652 = vtanh.pop %v1650
  %v1653 = vadd.f32 %v1651, 1.0
  %v1654 = vadd.f32 %v1652, 1.0
  %v1655 = vmul.f32 %v1653, 0.5
  %v1656 = vmul.f32 %v1654, 0.5
  %v1657 = vmul.f32 %v1636, %v1655
  %v1658 = vmul.f32 %v1639, %v1656
  %s1659 = scalar_lea.vmem %s11, 64
  %v1660 = vld [vmem:[%s1659] sm:$0xff]
  %v1661 = vld [vmem:[%s1659 + $0x8] sm:$0xff]
  %v1662 = vld [vmem:[%s1659 + $0x10] sm:$0xff]
  %v1663 = vld [vmem:[%s1659 + $0x18] sm:$0xff]
  %v1664 = vld [vmem:[%s1659 + $0x20] sm:$0xff]
  %v1665 = vld [vmem:[%s1659 + $0x28] sm:$0xff]
  %v1666 = vld [vmem:[%s1659 + $0x30] sm:$0xff]
  %v1667 = vld [vmem:[%s1659 + $0x38] sm:$0xff]
  %s1668 = scalar_lea.vmem %s12, 1
  %v1669 = vld [vmem:[%s1668] sm:$0x1]
  %v1671 = vperm.slane %v1669, 0
  %v1674 = vsel %vm842, %v1657, 0
  %v1677 = vsel %vm842, %v1658, 0
  %1679 = vmatpush.msra.mxu0 0.0
  %1680 = vmatpush.msra.mxu0 0.0
  %1681 = vmatpush.msra.mxu0 0.0
  %1682 = vmatpush.msra.mxu0 0.0
  %1683 = vmatpush.msra.mxu0 0.0
  %1684 = vmatpush.msra.mxu0 0.0
  %1685 = vmatpush.msra.mxu0 0.0
  %1686 = vmatpush.msra.mxu0 0.0
  %1687 = vmatpush.msra.mxu0 %v1667
  %1688 = vmatpush.msra.mxu0 %v1666
  %1689 = vmatpush.msra.mxu0 %v1665
  %1690 = vmatpush.msra.mxu0 %v1664
  %1691 = vmatpush.msra.mxu0 %v1663
  %1692 = vmatpush.msra.mxu0 %v1662
  %1693 = vmatpush.msra.mxu0 %v1661
  %1694 = vmatpush.msra.mxu0 %v1660
  %1695 = vmatmul.f32.gmra.mxu0 %v1674
  %v1696 = vpop.f32.mrf.mxu0
  %v1697 = vadd.f32 %v1671, %v1696
  %1698 = vmatmul.f32.gmra.mxu0 %v1677
  %v1699 = vpop.f32.mrf.mxu0
  %v1700 = vadd.f32 %v1671, %v1699
  %1701 = vdwg.mxu0
  %v1702 = vadd.f32 %v1600, %v1697
  %v1703 = vadd.f32 %v1601, %v1700
  %v1704 = vsel %vm78, %v1702, 0.0
  %1705 = vadd.xlane.f32.xlu0 %v1704
  %v1706 = vpop.xlane.xlu0 %1705
  %v1707 = vsel %vm78, %v1703, 0.0
  %1708 = vadd.xlane.f32.xlu0 %v1707
  %v1709 = vpop.xlane.xlu0 %1708
  %v1710 = vmul.f32 %v1706, %v724
  %v1711 = vmul.f32 %v1709, %v724
  %v1712 = vsub.f32 %v1702, %v1710
  %v1713 = vsub.f32 %v1703, %v1711
  %v1714 = vmul.f32 %v1712, %v1712
  %v1715 = vmul.f32 %v1713, %v1713
  %v1716 = vsel %vm78, %v1714, 0.0
  %1717 = vadd.xlane.f32.xlu0 %v1716
  %v1718 = vpop.xlane.xlu0 %1717
  %v1719 = vsel %vm78, %v1715, 0.0
  %1720 = vadd.xlane.f32.xlu0 %v1719
  %v1721 = vpop.xlane.xlu0 %1720
  %v1722 = vmul.f32 %v1718, %v724
  %v1723 = vmul.f32 %v1721, %v724
  %v1724 = vadd.f32 %v1722, 1e-07
  %v1725 = vadd.f32 %v1723, 1e-07
  %v1726 = vrsqrt.pop %v1724
  %v1727 = vmul.f32 %v1726, %v1724
  %v1728 = vmul.f32 %v1727, %v1726
  %v1729 = vmul.f32 0.5, %v1728
  %v1730 = vsub.f32 1.5, %v1729
  %v1731 = vmul.f32 %v1726, %v1730
  %vm1732 = vweird.f32 %v1724
  %vm1733 = vweird.f32 %v1726
  %vm1734 = vmor %vm1732, %vm1733
  %v1735 = vsel %vm1734, %v1726, %v1731
  %v1736 = vrsqrt.pop %v1725
  %v1737 = vmul.f32 %v1736, %v1725
  %v1738 = vmul.f32 %v1737, %v1736
  %v1739 = vmul.f32 0.5, %v1738
  %v1740 = vsub.f32 1.5, %v1739
  %v1741 = vmul.f32 %v1736, %v1740
  %vm1742 = vweird.f32 %v1725
  %vm1743 = vweird.f32 %v1736
  %vm1744 = vmor %vm1742, %vm1743
  %v1745 = vsel %vm1744, %v1736, %v1741
  %v1746 = vmul.f32 %v1712, %v1735
  %v1747 = vmul.f32 %v1713, %v1745
  %s1748 = scalar_lea.vmem %s13, 1
  %v1749 = vld [vmem:[%s1748] sm:$0x1]
  %v1751 = vperm.slane %v1749, 0
  %v1753 = vmul.f32 %v1746, %v1751
  %v1754 = vmul.f32 %v1747, %v1751
  %s1755 = scalar_lea.vmem %s14, 1
  %v1756 = vld [vmem:[%s1755] sm:$0x1]
  %v1758 = vperm.slane %v1756, 0
  %v1760 = vadd.f32 %v1753, %v1758
  %v1761 = vadd.f32 %v1754, %v1758
  %v1762 = vld [vmem:[%s15] sm:$0x1]
  %v1764 = vperm.slane %v1762, 0
  %v1766 = vmul.f32 %v1760, %v1764
  %v1767 = vmul.f32 %v1761, %v1764
  %v1770 = vrot.slane %v1767, 7
  %vm1771 = vcmask 1041409
  %v1772 = vsel %vm1771, %v1770, %v1766
  %vm1774 = vcmask 254976
  %v1775 = vsel %vm1774, %v1772, 0.0
  %1776 = vadd.xlane.f32.xlu0 %v1775
  %v1777 = vpop.xlane.xlu0 %1776
  %v1778 = vld [vmem:[#allocation2] sm:$0x1]
  %v1780 = vperm.slane %v1778, 0
  %v1782 = vadd.f32 %v1777, %v1780
  %v1783 = vxor.u32 %v1782, 2147483648
  %v1784 = vmul.f32 %v1783, 1.442695
  %v1785 = vpow.pop %v1784
  %v1786 = vadd.f32 %v1785, 1.0
  %v1787 = vrcp.pop %v1786
  %v1788 = vmul.f32 %v1786, %v1787
  %v1789 = vsub.f32 1.0, %v1788
  %v1790 = vmul.f32 %v1787, %v1789
  %v1791 = vadd.f32 %v1787, %v1790
  %vm1792 = vweird.f32 %v1786
  %vm1793 = vweird.f32 %v1787
  %vm1794 = vmor %vm1792, %vm1793
  %v1795 = vsel %vm1794, %v1787, %v1791
  %v1796 = vand.u32 2147483647, %v1786
  %vm1797 = vcmp.eq.f32.partialorder %v1796, 8.507059e+37
  %v1798 = vand.u32 %v1786, 2147483648
  %v1799 = vor.u32 1.1754944e-38, %v1798
  %v1800 = vsel %vm1797, %v1799, %v1795
  %v1801 = vmul.f32 1.0, %v1800
  %1803 = vset.pattern.permute.xlu0 0
  %1804 = vperm.xlu0 %1803, %v1801
  %v1805 = vpop.permute.xlu0 %1804
  %1807 = vst [vmem:[%s17] sm:$0x3] %v1805
  // Predicated region
  $region70: #{plagiarism_detector_forward.1} parent=0 // pred_check
    _
  $region71: #{plagiarism_detector_forward.1} parent=0 // pred_check_branch
    %1809 = sbr.rel (0) target = $region73
  $region72: #{plagiarism_detector_forward.1} parent=0 // pred_region
    _
  $region73: #{plagiarism_detector_forward.1} parent=0 // pred_fallthru
    _
  // Predicated region
  $region74: #{plagiarism_detector_forward.1} parent=0 // pred_check
    _
  $region75: #{plagiarism_detector_forward.1} parent=0 // pred_check_branch
    %1811 = sbr.rel (0) target = $region77
  $region76: #{plagiarism_detector_forward.1} parent=0 // pred_region
    _
  $region77: #{plagiarism_detector_forward.1} parent=0 // pred_fallthru
    _

</llo_original>
